<compile_context>
chip_gen: v7x
topology: tpu7x:2x2x1
jax: 0.10.0
libtpu: 0.0.40
codegen_flags: <defaults>
</compile_context>

<pallas_src>
import functools
import math

import jax
import jax.numpy as jnp
import numpy as np
from jax.experimental import pallas as pl
from jax.experimental.pallas import tpu as pltpu


_VMEM_LIMIT = 32 * 1024 * 1024  # safe scoped-VMEM budget on v5e / v6e / v7x


def _compiler_params():
    return pltpu.CompilerParams(dimension_semantics=("parallel",),
                                vmem_limit_bytes=_VMEM_LIMIT)


def _const_spec(a):
    """Full-array block that is resident across the batch grid (weights/biases)."""
    zeros = (0,) * a.ndim
    return pl.BlockSpec(a.shape, lambda b: zeros)


# ----------------------------------------------------------------------------
# In-kernel helpers (exact erf-based GELU, matching torch F.gelu default)
# ----------------------------------------------------------------------------
def _erf(x):
    # Abramowitz-Stegun 7.1.26 polynomial (max abs err ~1.5e-7); uses exp only.
    a1, a2, a3, a4, a5 = 0.254829592, -0.284496736, 1.421413741, -1.453152027, 1.061405429
    p = 0.3275911
    s = jnp.where(x >= 0.0, 1.0, -1.0)
    ax = jnp.abs(x)
    t = 1.0 / (1.0 + p * ax)
    poly = ((((a5 * t + a4) * t + a3) * t + a2) * t + a1) * t
    return s * (1.0 - poly * jnp.exp(-ax * ax))


def _gelu_exact(x):
    return 0.5 * x * (1.0 + _erf(x * 0.7071067811865476))


def _layernorm(z, g, b, eps):
    # biased variance over the last dim, like torch.nn.LayerNorm; f32 math.
    mu = jnp.mean(z, axis=-1, keepdims=True)
    zc = z - mu
    var = jnp.mean(zc * zc, axis=-1, keepdims=True)
    return zc * jax.lax.rsqrt(var + eps) * g + b


# ----------------------------------------------------------------------------
# Fused transformer encoder layer kernel (one grid step per batch element)
# ----------------------------------------------------------------------------
def _encoder_layer_kernel(x_ref, wqkv_ref, bqkv_ref, wout_ref, bout_ref,
                          ln1g_ref, ln1b_ref, wff1_ref, bff1_ref,
                          wff2_ref, bff2_ref, ln2g_ref, ln2b_ref,
                          o_ref, *, n_heads, eps):
    x = x_ref[0]                                   # (L, D) f32 residual stream
    L, D = x.shape
    hd = D // n_heads
    scale = 1.0 / math.sqrt(hd)

    # ---- self-attention ------------------------------------------------------
    qkv = jnp.dot(x.astype(jnp.bfloat16), wqkv_ref[...],
                  preferred_element_type=jnp.float32) + bqkv_ref[...]       # (L, 3D)
    o_heads = []
    for h in range(n_heads):                       # static unroll; heads are small
        lo, hi = h * hd, (h + 1) * hd
        q = (qkv[:, lo:hi] * scale).astype(jnp.bfloat16)                    # scale folded
        k = qkv[:, D + lo:D + hi].astype(jnp.bfloat16)
        v = qkv[:, 2 * D + lo:2 * D + hi].astype(jnp.bfloat16)
        s = jax.lax.dot_general(q, k, (((1,), (1,)), ((), ())),
                                preferred_element_type=jnp.float32)         # (L, L)
        m = jnp.max(s, axis=-1, keepdims=True)
        p = jnp.exp(s - m)
        p = p * pl.reciprocal(jnp.sum(p, axis=-1, keepdims=True), approx=True)
        o_heads.append(jnp.dot(p.astype(jnp.bfloat16), v,
                               preferred_element_type=jnp.float32))         # (L, hd)
    o_cat = jnp.concatenate(o_heads, axis=-1).astype(jnp.bfloat16)          # (L, D)
    attn = jnp.dot(o_cat, wout_ref[...],
                   preferred_element_type=jnp.float32) + bout_ref[...]      # (L, D)

    # ---- add & norm, feed-forward (exact GELU), add & norm --------------------
    h1 = _layernorm(x + attn, ln1g_ref[...], ln1b_ref[...], eps)
    f = jnp.dot(h1.astype(jnp.bfloat16), wff1_ref[...],
                preferred_element_type=jnp.float32) + bff1_ref[...]
    f = _gelu_exact(f)
    f = jnp.dot(f.astype(jnp.bfloat16), wff2_ref[...],
                preferred_element_type=jnp.float32) + bff2_ref[...]
    o_ref[0] = _layernorm(h1 + f, ln2g_ref[...], ln2b_ref[...], eps)


def encoder_layer(x, lp, n_heads, eps=1e-5):
    B, L, D = x.shape
    consts = (lp["w_qkv"].astype(jnp.bfloat16), lp["b_qkv"],
              lp["w_out"].astype(jnp.bfloat16), lp["b_out"],
              lp["ln1_g"], lp["ln1_b"],
              lp["w_ff1"].astype(jnp.bfloat16), lp["b_ff1"],
              lp["w_ff2"].astype(jnp.bfloat16), lp["b_ff2"],
              lp["ln2_g"], lp["ln2_b"])
    xs = pl.BlockSpec((1, L, D), lambda b: (b, 0, 0))
    return pl.pallas_call(
        functools.partial(_encoder_layer_kernel, n_heads=n_heads, eps=eps),
        out_shape=jax.ShapeDtypeStruct((B, L, D), jnp.float32),
        grid=(B,),
        in_specs=[xs] + [_const_spec(a) for a in consts],
        out_specs=xs,
        compiler_params=_compiler_params(),
    )(x, *consts)


# ----------------------------------------------------------------------------
# Fused head kernels: final LN + pointwise (+ bottleneck) + sigmoid / normalize
# ----------------------------------------------------------------------------
def _head_plain_kernel(x_ref, g_ref, b_ref, wpw_ref, bpw_ref, o_ref,
                       *, apply_ln, normalize, eps):
    x = x_ref[0]                                   # (L, D)
    if apply_ln:
        x = _layernorm(x, g_ref[...], b_ref[...], eps)
    y = jnp.dot(x.astype(jnp.bfloat16), wpw_ref[...],
                preferred_element_type=jnp.float32) + bpw_ref[...]          # (L, J)
    if normalize:                                  # F.normalize(p=2, dim=1) == over L
        n = jnp.sqrt(jnp.sum(y * y, axis=0, keepdims=True))
        y = y / jnp.maximum(n, 1e-12)
    else:
        y = jax.nn.sigmoid(y)
    o_ref[0] = y


def head_plain(x, ln_g, ln_b, w_pw, b_pw, *, apply_ln, normalize, eps=1e-5):
    B, L, D = x.shape
    J = w_pw.shape[1]
    consts = (ln_g, ln_b, w_pw.astype(jnp.bfloat16), b_pw)
    return pl.pallas_call(
        functools.partial(_head_plain_kernel, apply_ln=apply_ln,
                          normalize=normalize, eps=eps),
        out_shape=jax.ShapeDtypeStruct((B, L, J), jnp.float32),
        grid=(B,),
        in_specs=[pl.BlockSpec((1, L, D), lambda b: (b, 0, 0))]
                + [_const_spec(a) for a in consts],
        out_specs=pl.BlockSpec((1, L, J), lambda b: (b, 0, 0)),
        compiler_params=_compiler_params(),
    )(x, *consts)


def _head_bottleneck_kernel(x_ref, g_ref, b_ref, wpwt_ref, bpwt_ref,
                            w1_ref, b1_ref, w2_ref, b2_ref, o_ref,
                            *, apply_ln, normalize, eps, descriptors):
    x = x_ref[0]                                   # (L, D)
    if apply_ln:
        x = _layernorm(x, g_ref[...], b_ref[...], eps)
    # (LN(x) @ Wpw + bpw) transposed -> (J, L); computed directly from Wpw^T so no
    # in-kernel transpose is needed before the per-descriptor matmuls.
    yT = jax.lax.dot_general(wpwt_ref[...], x.astype(jnp.bfloat16),
                             (((1,), (1,)), ((), ())),
                             preferred_element_type=jnp.float32) + bpwt_ref[...]
    b1 = b1_ref[...]
    b2 = b2_ref[...]
    for j in range(descriptors):                   # static unroll; J is small
        r = yT[j:j + 1, :].astype(jnp.bfloat16)                             # (1, L)
        t = jnp.dot(r, w1_ref[j],
                    preferred_element_type=jnp.float32) + b1[j:j + 1, :]    # (1, hid)
        z = jnp.dot(t.astype(jnp.bfloat16), w2_ref[j],
                    preferred_element_type=jnp.float32) + b2[j:j + 1, :]    # (1, L)
        if normalize:                              # over L, per (batch, descriptor)
            n = jnp.sqrt(jnp.sum(z * z, axis=-1, keepdims=True))
            z = z / jnp.maximum(n, 1e-12)
        else:
            z = jax.nn.sigmoid(z)
        o_ref[0, j:j + 1, :] = z


def head_bottleneck(x, ln_g, ln_b, w_pw, b_pw, w1, b1, w2, b2,
                    *, apply_ln, normalize, eps=1e-5):
    B, L, D = x.shape
    J = w_pw.shape[1]
    consts = (ln_g, ln_b,
              jnp.transpose(w_pw).astype(jnp.bfloat16),   # (J, D)
              jnp.transpose(b_pw),                        # (J, 1)
              w1.astype(jnp.bfloat16),                    # (J, L, hid)
              b1[0],                                      # (J, hid)
              w2.astype(jnp.bfloat16),                    # (J, hid, L)
              b2[0])                                      # (J, L)
    out_jl = pl.pallas_call(
        functools.partial(_head_bottleneck_kernel, apply_ln=apply_ln,
                          normalize=normalize, eps=eps, descriptors=J),
        out_shape=jax.ShapeDtypeStruct((B, J, L), jnp.float32),
        grid=(B,),
        in_specs=[pl.BlockSpec((1, L, D), lambda b: (b, 0, 0))]
                + [_const_spec(a) for a in consts],
        out_specs=pl.BlockSpec((1, J, L), lambda b: (b, 0, 0)),
        compiler_params=_compiler_params(),
    )(x, *consts)
    # final tiny (B, J, L) -> (B, L, J) permute == the module's x.permute(0, 2, 1)
    return jnp.transpose(out_jl, (0, 2, 1))


# ----------------------------------------------------------------------------
# Module forward (thin glue around the fused kernels)
# ----------------------------------------------------------------------------
def sc_geo_layout_forward(x_nchw, params, cfg):
    B, C, H, W = x_nchw.shape
    D, L, J = cfg["d_model"], cfg["max_len"], cfg["descriptors"]
    assert C == D and H * W == L and D % cfg["tr_heads"] == 0

    # x.view(B, C, H*W).permute(0, 2, 1)
    x = jnp.transpose(x_nchw.reshape(B, C, L), (0, 2, 1)).astype(jnp.float32)

    if cfg["tr_layers"] != 0:
        x = x + params["pe"]                       # LearnablePE (dropout = identity)
        for lp in params["layers"]:
            x = encoder_layer(x, lp, cfg["tr_heads"])
        ln_g, ln_b = params["ln_f_g"], params["ln_f_b"]
        apply_ln = True                            # TransformerEncoder's final norm
    else:
        ln_g = jnp.ones((1, D), jnp.float32)
        ln_b = jnp.zeros((1, D), jnp.float32)
        apply_ln = False

    if cfg["normalize"] and cfg["orthogonalize"]:
        # TODO(synk): torch.linalg.qr (orthogonalize path) has no clean Pallas equivalent.
        raise NotImplementedError("orthogonalize (QR) path not implemented")

    if cfg["bottleneck"]:
        return head_bottleneck(x, ln_g, ln_b, params["w_pw"], params["b_pw"],
                               params["w1"], params["b1"], params["w2"], params["b2"],
                               apply_ln=apply_ln, normalize=cfg["normalize"])
    return head_plain(x, ln_g, ln_b, params["w_pw"], params["b_pw"],
                      apply_ln=apply_ln, normalize=cfg["normalize"])


# ----------------------------------------------------------------------------
# Deterministic synthetic parameter init (shapes per the module's __init__)
# ----------------------------------------------------------------------------
def init_params(key, cfg):
    D, L, J, dh = cfg["d_model"], cfg["max_len"], cfg["descriptors"], cfg["d_hid"]
    hid = int(L / 2.0)
    ks = iter(jax.random.split(key, 32))

    def nrm(shape, std=0.02):
        return std * jax.random.normal(next(ks), shape, jnp.float32)

    params = {"pe": nrm((1, L, D))}
    layers = []
    for _ in range(cfg["tr_layers"]):
        layers.append(dict(
            w_qkv=nrm((D, 3 * D)), b_qkv=jnp.zeros((1, 3 * D), jnp.float32),
            w_out=nrm((D, D)),     b_out=jnp.zeros((1, D), jnp.float32),
            ln1_g=jnp.ones((1, D), jnp.float32), ln1_b=jnp.zeros((1, D), jnp.float32),
            w_ff1=nrm((D, dh)), b_ff1=jnp.zeros((1, dh), jnp.float32),
            w_ff2=nrm((dh, D)), b_ff2=jnp.zeros((1, D), jnp.float32),
            ln2_g=jnp.ones((1, D), jnp.float32), ln2_b=jnp.zeros((1, D), jnp.float32),
        ))
    params["layers"] = layers
    params["ln_f_g"] = jnp.ones((1, D), jnp.float32)
    params["ln_f_b"] = jnp.zeros((1, D), jnp.float32)
    params["w_pw"] = nrm((D, J))
    params["b_pw"] = jnp.zeros((1, J), jnp.float32)
    # init_weights_: normal(std=0.005) weights, constant(0.1) biases
    params["w1"] = nrm((J, L, hid), std=0.005)
    params["b1"] = jnp.full((1, J, hid), 0.1, jnp.float32)
    params["w2"] = nrm((J, hid, L), std=0.005)
    params["b2"] = jnp.full((1, J, L), 0.1, jnp.float32)
    return params


# ----------------------------------------------------------------------------
# Pure-JAX reference (mirrors the torch forward, eval mode) for validation
# ----------------------------------------------------------------------------
def ref_forward(x_nchw, params, cfg):
    hp = jax.lax.Precision.HIGHEST
    B, C, H, W = x_nchw.shape
    L = H * W
    nh = cfg["tr_heads"]
    hd = C // nh
    x = jnp.transpose(x_nchw.reshape(B, C, L), (0, 2, 1)).astype(jnp.float32)

    def ln(z, g, b, eps=1e-5):
        mu = z.mean(-1, keepdims=True)
        var = ((z - mu) ** 2).mean(-1, keepdims=True)
        return (z - mu) * jax.lax.rsqrt(var + eps) * g + b

    if cfg["tr_layers"] != 0:
        x = x + params["pe"]
        for lp in params["layers"]:
            qkv = jnp.einsum("bld,de->ble", x, lp["w_qkv"], precision=hp) + lp["b_qkv"]
            q, k, v = jnp.split(qkv, 3, axis=-1)
            heads = lambda t: t.reshape(B, L, nh, hd).transpose(0, 2, 1, 3)
            q, k, v = heads(q), heads(k), heads(v)
            s = jnp.einsum("bhqd,bhkd->bhqk", q, k, precision=hp) / math.sqrt(hd)
            a = jax.nn.softmax(s, axis=-1)
            o = jnp.einsum("bhqk,bhkd->bhqd", a, v, precision=hp)
            o = o.transpose(0, 2, 1, 3).reshape(B, L, C)
            o = jnp.einsum("bld,de->ble", o, lp["w_out"], precision=hp) + lp["b_out"]
            x = ln(x + o, lp["ln1_g"], lp["ln1_b"])
            h = jax.nn.gelu(
                jnp.einsum("bld,df->blf", x, lp["w_ff1"], precision=hp) + lp["b_ff1"],
                approximate=False)
            h = jnp.einsum("blf,fd->bld", h, lp["w_ff2"], precision=hp) + lp["b_ff2"]
            x = ln(x + h, lp["ln2_g"], lp["ln2_b"])
        x = ln(x, params["ln_f_g"], params["ln_f_b"])

    x = jnp.einsum("bld,dj->blj", x, params["w_pw"], precision=hp) + params["b_pw"]

    if cfg["bottleneck"]:
        x = jnp.einsum("bdj,jdi->bji", x, params["w1"], precision=hp) + params["b1"]
        x = jnp.einsum("bji,jid->bjd", x, params["w2"], precision=hp) + params["b2"]
        x = jnp.transpose(x, (0, 2, 1))
    if cfg["normalize"]:
        n = jnp.sqrt(jnp.sum(x * x, axis=1, keepdims=True))
        x = x / jnp.maximum(n, 1e-12)
    else:
        x = jax.nn.sigmoid(x)
    return x


# ----------------------------------------------------------------------------
if __name__ == "__main__":
    # Small config consistent with the module: L = H*W = max_len, d_model = C.
    cfg_base = dict(max_len=16, d_model=32, descriptors=8, tr_heads=4,
                    tr_layers=2, d_hid=64, normalize=False, orthogonalize=False,
                    bottleneck=False)
    key = jax.random.PRNGKey(0)
    kx, kp = jax.random.split(key)
    B, H, W = 2, 4, 4
    x = jax.random.normal(kx, (B, cfg_base["d_model"], H, W), jnp.float32)
    params = init_params(kp, cfg_base)

    # Exercise all supported output heads: {sigmoid, L2-normalize} x {bottleneck on/off}.
    for bneck in (False, True):
        for norm in (False, True):
            cfg = dict(cfg_base, bottleneck=bneck, normalize=norm)
            fwd = jax.jit(functools.partial(sc_geo_layout_forward, params=params, cfg=cfg))
            out = jax.block_until_ready(fwd(x))
            ref = ref_forward(x, params, cfg)
            np.testing.assert_allclose(np.asarray(out), np.asarray(ref),
                                       atol=2e-2, rtol=2e-2)

    print("KERNEL_OK")
</pallas_src>

<mosaic_0001>
module attributes {stable_mosaic.version = 11 : i64} {
  func.func @_head_plain_kernel(%arg0: i32, %arg1: memref<1x16x32xf32, #tpu.memory_space<vmem>>, %arg2: memref<1x32xf32, #tpu.memory_space<vmem>>, %arg3: memref<1x32xf32, #tpu.memory_space<vmem>>, %arg4: memref<32x8xbf16, #tpu.memory_space<vmem>>, %arg5: memref<1x8xf32, #tpu.memory_space<vmem>>, %arg6: memref<1x16x8xf32, #tpu.memory_space<vmem>>) attributes {dimension_semantics = [#tpu.dimension_semantics<parallel>], iteration_bounds = array<i64: 2>, scalar_prefetch = 0 : i64, scratch_operands = 0 : i64, tpu.core_type = #tpu.core_type<tc>, window_params = [{transform_indices = @transform_0, window_bounds = array<i64: 1, 16, 32>}, {pipeline_mode = #tpu.pipeline_mode<synchronous>, transform_indices = @transform_1, window_bounds = array<i64: 1, 32>}, {pipeline_mode = #tpu.pipeline_mode<synchronous>, transform_indices = @transform_2, window_bounds = array<i64: 1, 32>}, {pipeline_mode = #tpu.pipeline_mode<synchronous>, transform_indices = @transform_3, window_bounds = array<i64: 32, 8>}, {pipeline_mode = #tpu.pipeline_mode<synchronous>, transform_indices = @transform_4, window_bounds = array<i64: 1, 8>}, {transform_indices = @transform_5, window_bounds = array<i64: 1, 16, 8>}]} {
    %c0 = arith.constant 0 : index
    %c0_0 = arith.constant 0 : index
    %c0_1 = arith.constant 0 : index
    %0 = vector.load %arg1[%c0, %c0_0, %c0_1] : memref<1x16x32xf32, #tpu.memory_space<vmem>>, vector<1x16x32xf32>
    %1 = vector.shape_cast %0 : vector<1x16x32xf32> to vector<16x32xf32>
    %c0_2 = arith.constant 0 : index
    %c0_3 = arith.constant 0 : index
    %2 = vector.load %arg2[%c0_2, %c0_3] : memref<1x32xf32, #tpu.memory_space<vmem>>, vector<1x32xf32>
    %c0_4 = arith.constant 0 : index
    %c0_5 = arith.constant 0 : index
    %3 = vector.load %arg3[%c0_4, %c0_5] : memref<1x32xf32, #tpu.memory_space<vmem>>, vector<1x32xf32>
    %cst = arith.constant dense<0.000000e+00> : vector<16xf32>
    %4 = vector.multi_reduction <add>, %1, %cst [1] : vector<16x32xf32> to vector<16xf32>
    %5 = vector.shape_cast %4 : vector<16xf32> to vector<16x1xf32>
    %cst_6 = arith.constant 3.200000e+01 : f32
    %6 = vector.broadcast %cst_6 : f32 to vector<16x1xf32>
    %7 = arith.divf %5, %6 : vector<16x1xf32>
    %8 = vector.broadcast %7 : vector<16x1xf32> to vector<16x32xf32>
    %9 = arith.subf %1, %8 : vector<16x32xf32>
    %10 = arith.mulf %9, %9 : vector<16x32xf32>
    %cst_7 = arith.constant dense<0.000000e+00> : vector<16xf32>
    %11 = vector.multi_reduction <add>, %10, %cst_7 [1] : vector<16x32xf32> to vector<16xf32>
    %12 = vector.shape_cast %11 : vector<16xf32> to vector<16x1xf32>
    %cst_8 = arith.constant 3.200000e+01 : f32
    %13 = vector.broadcast %cst_8 : f32 to vector<16x1xf32>
    %14 = arith.divf %12, %13 : vector<16x1xf32>
    %cst_9 = arith.constant 9.99999974E-6 : f32
    %15 = vector.broadcast %cst_9 : f32 to vector<16x1xf32>
    %16 = arith.addf %14, %15 : vector<16x1xf32>
    %17 = math.rsqrt %16 : vector<16x1xf32>
    %18 = vector.broadcast %17 : vector<16x1xf32> to vector<16x32xf32>
    %19 = arith.mulf %9, %18 : vector<16x32xf32>
    %20 = vector.broadcast %2 : vector<1x32xf32> to vector<16x32xf32>
    %21 = arith.mulf %19, %20 : vector<16x32xf32>
    %22 = vector.broadcast %3 : vector<1x32xf32> to vector<16x32xf32>
    %23 = arith.addf %21, %22 : vector<16x32xf32>
    %24 = arith.truncf %23 : vector<16x32xf32> to vector<16x32xbf16>
    %c0_10 = arith.constant 0 : index
    %c0_11 = arith.constant 0 : index
    %25 = vector.load %arg4[%c0_10, %c0_11] : memref<32x8xbf16, #tpu.memory_space<vmem>>, vector<32x8xbf16>
    %cst_12 = arith.constant dense<0.000000e+00> : vector<16x8xf32>
    %26 = tpu.matmul %24, %25, %cst_12 {dimension_numbers = #tpu.dot_dimension_numbers<[1], [0], [0], [1], [0, 0, 1, 1], [], []>} : vector<16x32xbf16>, vector<32x8xbf16>, vector<16x8xf32> -> vector<16x8xf32>
    %c0_13 = arith.constant 0 : index
    %c0_14 = arith.constant 0 : index
    %27 = vector.load %arg5[%c0_13, %c0_14] : memref<1x8xf32, #tpu.memory_space<vmem>>, vector<1x8xf32>
    %28 = vector.broadcast %27 : vector<1x8xf32> to vector<16x8xf32>
    %29 = arith.addf %26, %28 : vector<16x8xf32>
    %30 = arith.negf %29 : vector<16x8xf32>
    %31 = math.exp %30 : vector<16x8xf32>
    %cst_15 = arith.constant 1.000000e+00 : f32
    %32 = vector.broadcast %cst_15 : f32 to vector<16x8xf32>
    %33 = arith.addf %32, %31 : vector<16x8xf32>
    %34 = arith.divf %32, %33 : vector<16x8xf32>
    %c0_16 = arith.constant 0 : index
    %c0_17 = arith.constant 0 : index
    %c0_18 = arith.constant 0 : index
    %35 = vector.load %arg6[%c0_16, %c0_17, %c0_18] : memref<1x16x8xf32, #tpu.memory_space<vmem>>, vector<1x16x8xf32>
    %36 = vector.shape_cast %35 : vector<1x16x8xf32> to vector<16x8xf32>
    %37 = vector.shape_cast %34 : vector<16x8xf32> to vector<1x16x8xf32>
    tpu.vector_store %arg6[%c0_16, %c0_17, %c0_18], %37 {strides = array<i32>} : memref<1x16x8xf32, #tpu.memory_space<vmem>>, vector<1x16x8xf32>,
    return
  }
  func.func @transform_0(%arg0: i32) -> (i32, i32, i32) {
    %c0_i32 = arith.constant 0 : i32
    %c0_i32_0 = arith.constant 0 : i32
    %c0_i32_1 = arith.constant 0 : i32
    return %arg0, %c0_i32, %c0_i32_0 : i32, i32, i32
  }
  func.func @transform_1(%arg0: i32) -> (i32, i32) {
    %c0_i32 = arith.constant 0 : i32
    %c0_i32_0 = arith.constant 0 : i32
    %c0_i32_1 = arith.constant 0 : i32
    return %c0_i32, %c0_i32_0 : i32, i32
  }
  func.func @transform_2(%arg0: i32) -> (i32, i32) {
    %c0_i32 = arith.constant 0 : i32
    %c0_i32_0 = arith.constant 0 : i32
    %c0_i32_1 = arith.constant 0 : i32
    return %c0_i32, %c0_i32_0 : i32, i32
  }
  func.func @transform_3(%arg0: i32) -> (i32, i32) {
    %c0_i32 = arith.constant 0 : i32
    %c0_i32_0 = arith.constant 0 : i32
    %c0_i32_1 = arith.constant 0 : i32
    return %c0_i32, %c0_i32_0 : i32, i32
  }
  func.func @transform_4(%arg0: i32) -> (i32, i32) {
    %c0_i32 = arith.constant 0 : i32
    %c0_i32_0 = arith.constant 0 : i32
    %c0_i32_1 = arith.constant 0 : i32
    return %c0_i32, %c0_i32_0 : i32, i32
  }
  func.func @transform_5(%arg0: i32) -> (i32, i32, i32) {
    %c0_i32 = arith.constant 0 : i32
    %c0_i32_0 = arith.constant 0 : i32
    %c0_i32_1 = arith.constant 0 : i32
    return %arg0, %c0_i32, %c0_i32_0 : i32, i32, i32
  }
}

module attributes {stable_mosaic.version = 11 : i64} {
  func.func @_encoder_layer_kernel(%arg0: i32, %arg1: memref<1x16x32xf32, #tpu.memory_space<vmem>>, %arg2: memref<32x96xbf16, #tpu.memory_space<vmem>>, %arg3: memref<1x96xf32, #tpu.memory_space<vmem>>, %arg4: memref<32x32xbf16, #tpu.memory_space<vmem>>, %arg5: memref<1x32xf32, #tpu.memory_space<vmem>>, %arg6: memref<1x32xf32, #tpu.memory_space<vmem>>, %arg7: memref<1x32xf32, #tpu.memory_space<vmem>>, %arg8: memref<32x64xbf16, #tpu.memory_space<vmem>>, %arg9: memref<1x64xf32, #tpu.memory_space<vmem>>, %arg10: memref<64x32xbf16, #tpu.memory_space<vmem>>, %arg11: memref<1x32xf32, #tpu.memory_space<vmem>>, %arg12: memref<1x32xf32, #tpu.memory_space<vmem>>, %arg13: memref<1x32xf32, #tpu.memory_space<vmem>>, %arg14: memref<1x16x32xf32, #tpu.memory_space<vmem>>) attributes {dimension_semantics = [#tpu.dimension_semantics<parallel>], iteration_bounds = array<i64: 2>, scalar_prefetch = 0 : i64, scratch_operands = 0 : i64, tpu.core_type = #tpu.core_type<tc>, window_params = [{transform_indices = @transform_0, window_bounds = array<i64: 1, 16, 32>}, {pipeline_mode = #tpu.pipeline_mode<synchronous>, transform_indices = @transform_1, window_bounds = array<i64: 32, 96>}, {pipeline_mode = #tpu.pipeline_mode<synchronous>, transform_indices = @transform_2, window_bounds = array<i64: 1, 96>}, {pipeline_mode = #tpu.pipeline_mode<synchronous>, transform_indices = @transform_3, window_bounds = array<i64: 32, 32>}, {pipeline_mode = #tpu.pipeline_mode<synchronous>, transform_indices = @transform_4, window_bounds = array<i64: 1, 32>}, {pipeline_mode = #tpu.pipeline_mode<synchronous>, transform_indices = @transform_5, window_bounds = array<i64: 1, 32>}, {pipeline_mode = #tpu.pipeline_mode<synchronous>, transform_indices = @transform_6, window_bounds = array<i64: 1, 32>}, {pipeline_mode = #tpu.pipeline_mode<synchronous>, transform_indices = @transform_7, window_bounds = array<i64: 32, 64>}, {pipeline_mode = #tpu.pipeline_mode<synchronous>, transform_indices = @transform_8, window_bounds = array<i64: 1, 64>}, {pipeline_mode = #tpu.pipeline_mode<synchronous>, transform_indices = @transform_9, window_bounds = array<i64: 64, 32>}, {pipeline_mode = #tpu.pipeline_mode<synchronous>, transform_indices = @transform_10, window_bounds = array<i64: 1, 32>}, {pipeline_mode = #tpu.pipeline_mode<synchronous>, transform_indices = @transform_11, window_bounds = array<i64: 1, 32>}, {pipeline_mode = #tpu.pipeline_mode<synchronous>, transform_indices = @transform_12, window_bounds = array<i64: 1, 32>}, {transform_indices = @transform_13, window_bounds = array<i64: 1, 16, 32>}]} {
    %c0 = arith.constant 0 : index
    %c0_0 = arith.constant 0 : index
    %c0_1 = arith.constant 0 : index
    %0 = vector.load %arg1[%c0, %c0_0, %c0_1] : memref<1x16x32xf32, #tpu.memory_space<vmem>>, vector<1x16x32xf32>
    %1 = vector.shape_cast %0 : vector<1x16x32xf32> to vector<16x32xf32>
    %2 = arith.truncf %1 : vector<16x32xf32> to vector<16x32xbf16>
    %c0_2 = arith.constant 0 : index
    %c0_3 = arith.constant 0 : index
    %3 = vector.load %arg2[%c0_2, %c0_3] : memref<32x96xbf16, #tpu.memory_space<vmem>>, vector<32x96xbf16>
    %cst = arith.constant dense<0.000000e+00> : vector<16x96xf32>
    %4 = tpu.matmul %2, %3, %cst {dimension_numbers = #tpu.dot_dimension_numbers<[1], [0], [0], [1], [0, 0, 1, 1], [], []>} : vector<16x32xbf16>, vector<32x96xbf16>, vector<16x96xf32> -> vector<16x96xf32>
    %c0_4 = arith.constant 0 : index
    %c0_5 = arith.constant 0 : index
    %5 = vector.load %arg3[%c0_4, %c0_5] : memref<1x96xf32, #tpu.memory_space<vmem>>, vector<1x96xf32>
    %6 = vector.broadcast %5 : vector<1x96xf32> to vector<16x96xf32>
    %7 = arith.addf %4, %6 : vector<16x96xf32>
    %8 = vector.extract_strided_slice %7 {offsets = [0, 0], sizes = [16, 8], strides = [1, 1]} : vector<16x96xf32> to vector<16x8xf32>
    %cst_6 = arith.constant 0.353553385 : f32
    %9 = vector.broadcast %cst_6 : f32 to vector<16x8xf32>
    %10 = arith.mulf %8, %9 : vector<16x8xf32>
    %11 = arith.truncf %10 : vector<16x8xf32> to vector<16x8xbf16>
    %12 = vector.extract_strided_slice %7 {offsets = [0, 32], sizes = [16, 8], strides = [1, 1]} : vector<16x96xf32> to vector<16x8xf32>
    %13 = arith.truncf %12 : vector<16x8xf32> to vector<16x8xbf16>
    %14 = vector.extract_strided_slice %7 {offsets = [0, 64], sizes = [16, 8], strides = [1, 1]} : vector<16x96xf32> to vector<16x8xf32>
    %15 = arith.truncf %14 : vector<16x8xf32> to vector<16x8xbf16>
    %cst_7 = arith.constant dense<0.000000e+00> : vector<16x16xf32>
    %16 = tpu.matmul %11, %13, %cst_7 {dimension_numbers = #tpu.dot_dimension_numbers<[1], [1], [0], [0], [0, 0, 1, 0], [], []>} : vector<16x8xbf16>, vector<16x8xbf16>, vector<16x16xf32> -> vector<16x16xf32>
    %cst_8 = arith.constant dense<0xFF800000> : vector<16xf32>
    %17 = vector.multi_reduction <maximumf>, %16, %cst_8 [1] : vector<16x16xf32> to vector<16xf32>
    %18 = vector.shape_cast %17 : vector<16xf32> to vector<16x1xf32>
    %19 = vector.broadcast %18 : vector<16x1xf32> to vector<16x16xf32>
    %20 = arith.subf %16, %19 : vector<16x16xf32>
    %21 = math.exp %20 : vector<16x16xf32>
    %cst_9 = arith.constant dense<0.000000e+00> : vector<16xf32>
    %22 = vector.multi_reduction <add>, %21, %cst_9 [1] : vector<16x16xf32> to vector<16xf32>
    %23 = vector.shape_cast %22 : vector<16xf32> to vector<16x1xf32>
    %24 = tpu.reciprocal %23 {approx = true} : vector<16x1xf32> -> vector<16x1xf32>
    %25 = vector.broadcast %24 : vector<16x1xf32> to vector<16x16xf32>
    %26 = arith.mulf %21, %25 : vector<16x16xf32>
    %27 = arith.truncf %26 : vector<16x16xf32> to vector<16x16xbf16>
    %cst_10 = arith.constant dense<0.000000e+00> : vector<16x8xf32>
    %28 = tpu.matmul %27, %15, %cst_10 {dimension_numbers = #tpu.dot_dimension_numbers<[1], [0], [0], [1], [0, 0, 1, 1], [], []>} : vector<16x16xbf16>, vector<16x8xbf16>, vector<16x8xf32> -> vector<16x8xf32>
    %29 = vector.extract_strided_slice %7 {offsets = [0, 8], sizes = [16, 8], strides = [1, 1]} : vector<16x96xf32> to vector<16x8xf32>
    %cst_11 = arith.constant 0.353553385 : f32
    %30 = vector.broadcast %cst_11 : f32 to vector<16x8xf32>
    %31 = arith.mulf %29, %30 : vector<16x8xf32>
    %32 = arith.truncf %31 : vector<16x8xf32> to vector<16x8xbf16>
    %33 = vector.extract_strided_slice %7 {offsets = [0, 40], sizes = [16, 8], strides = [1, 1]} : vector<16x96xf32> to vector<16x8xf32>
    %34 = arith.truncf %33 : vector<16x8xf32> to vector<16x8xbf16>
    %35 = vector.extract_strided_slice %7 {offsets = [0, 72], sizes = [16, 8], strides = [1, 1]} : vector<16x96xf32> to vector<16x8xf32>
    %36 = arith.truncf %35 : vector<16x8xf32> to vector<16x8xbf16>
    %cst_12 = arith.constant dense<0.000000e+00> : vector<16x16xf32>
    %37 = tpu.matmul %32, %34, %cst_12 {dimension_numbers = #tpu.dot_dimension_numbers<[1], [1], [0], [0], [0, 0, 1, 0], [], []>} : vector<16x8xbf16>, vector<16x8xbf16>, vector<16x16xf32> -> vector<16x16xf32>
    %cst_13 = arith.constant dense<0xFF800000> : vector<16xf32>
    %38 = vector.multi_reduction <maximumf>, %37, %cst_13 [1] : vector<16x16xf32> to vector<16xf32>
    %39 = vector.shape_cast %38 : vector<16xf32> to vector<16x1xf32>
    %40 = vector.broadcast %39 : vector<16x1xf32> to vector<16x16xf32>
    %41 = arith.subf %37, %40 : vector<16x16xf32>
    %42 = math.exp %41 : vector<16x16xf32>
    %cst_14 = arith.constant dense<0.000000e+00> : vector<16xf32>
    %43 = vector.multi_reduction <add>, %42, %cst_14 [1] : vector<16x16xf32> to vector<16xf32>
    %44 = vector.shape_cast %43 : vector<16xf32> to vector<16x1xf32>
    %45 = tpu.reciprocal %44 {approx = true} : vector<16x1xf32> -> vector<16x1xf32>
    %46 = vector.broadcast %45 : vector<16x1xf32> to vector<16x16xf32>
    %47 = arith.mulf %42, %46 : vector<16x16xf32>
    %48 = arith.truncf %47 : vector<16x16xf32> to vector<16x16xbf16>
    %cst_15 = arith.constant dense<0.000000e+00> : vector<16x8xf32>
    %49 = tpu.matmul %48, %36, %cst_15 {dimension_numbers = #tpu.dot_dimension_numbers<[1], [0], [0], [1], [0, 0, 1, 1], [], []>} : vector<16x16xbf16>, vector<16x8xbf16>, vector<16x8xf32> -> vector<16x8xf32>
    %50 = vector.extract_strided_slice %7 {offsets = [0, 16], sizes = [16, 8], strides = [1, 1]} : vector<16x96xf32> to vector<16x8xf32>
    %cst_16 = arith.constant 0.353553385 : f32
    %51 = vector.broadcast %cst_16 : f32 to vector<16x8xf32>
    %52 = arith.mulf %50, %51 : vector<16x8xf32>
    %53 = arith.truncf %52 : vector<16x8xf32> to vector<16x8xbf16>
    %54 = vector.extract_strided_slice %7 {offsets = [0, 48], sizes = [16, 8], strides = [1, 1]} : vector<16x96xf32> to vector<16x8xf32>
    %55 = arith.truncf %54 : vector<16x8xf32> to vector<16x8xbf16>
    %56 = vector.extract_strided_slice %7 {offsets = [0, 80], sizes = [16, 8], strides = [1, 1]} : vector<16x96xf32> to vector<16x8xf32>
    %57 = arith.truncf %56 : vector<16x8xf32> to vector<16x8xbf16>
    %cst_17 = arith.constant dense<0.000000e+00> : vector<16x16xf32>
    %58 = tpu.matmul %53, %55, %cst_17 {dimension_numbers = #tpu.dot_dimension_numbers<[1], [1], [0], [0], [0, 0, 1, 0], [], []>} : vector<16x8xbf16>, vector<16x8xbf16>, vector<16x16xf32> -> vector<16x16xf32>
    %cst_18 = arith.constant dense<0xFF800000> : vector<16xf32>
    %59 = vector.multi_reduction <maximumf>, %58, %cst_18 [1] : vector<16x16xf32> to vector<16xf32>
    %60 = vector.shape_cast %59 : vector<16xf32> to vector<16x1xf32>
    %61 = vector.broadcast %60 : vector<16x1xf32> to vector<16x16xf32>
    %62 = arith.subf %58, %61 : vector<16x16xf32>
    %63 = math.exp %62 : vector<16x16xf32>
    %cst_19 = arith.constant dense<0.000000e+00> : vector<16xf32>
    %64 = vector.multi_reduction <add>, %63, %cst_19 [1] : vector<16x16xf32> to vector<16xf32>
    %65 = vector.shape_cast %64 : vector<16xf32> to vector<16x1xf32>
    %66 = tpu.reciprocal %65 {approx = true} : vector<16x1xf32> -> vector<16x1xf32>
    %67 = vector.broadcast %66 : vector<16x1xf32> to vector<16x16xf32>
    %68 = arith.mulf %63, %67 : vector<16x16xf32>
    %69 = arith.truncf %68 : vector<16x16xf32> to vector<16x16xbf16>
    %cst_20 = arith.constant dense<0.000000e+00> : vector<16x8xf32>
    %70 = tpu.matmul %69, %57, %cst_20 {dimension_numbers = #tpu.dot_dimension_numbers<[1], [0], [0], [1], [0, 0, 1, 1], [], []>} : vector<16x16xbf16>, vector<16x8xbf16>, vector<16x8xf32> -> vector<16x8xf32>
    %71 = vector.extract_strided_slice %7 {offsets = [0, 24], sizes = [16, 8], strides = [1, 1]} : vector<16x96xf32> to vector<16x8xf32>
    %cst_21 = arith.constant 0.353553385 : f32
    %72 = vector.broadcast %cst_21 : f32 to vector<16x8xf32>
    %73 = arith.mulf %71, %72 : vector<16x8xf32>
    %74 = arith.truncf %73 : vector<16x8xf32> to vector<16x8xbf16>
    %75 = vector.extract_strided_slice %7 {offsets = [0, 56], sizes = [16, 8], strides = [1, 1]} : vector<16x96xf32> to vector<16x8xf32>
    %76 = arith.truncf %75 : vector<16x8xf32> to vector<16x8xbf16>
    %77 = vector.extract_strided_slice %7 {offsets = [0, 88], sizes = [16, 8], strides = [1, 1]} : vector<16x96xf32> to vector<16x8xf32>
    %78 = arith.truncf %77 : vector<16x8xf32> to vector<16x8xbf16>
    %cst_22 = arith.constant dense<0.000000e+00> : vector<16x16xf32>
    %79 = tpu.matmul %74, %76, %cst_22 {dimension_numbers = #tpu.dot_dimension_numbers<[1], [1], [0], [0], [0, 0, 1, 0], [], []>} : vector<16x8xbf16>, vector<16x8xbf16>, vector<16x16xf32> -> vector<16x16xf32>
    %cst_23 = arith.constant dense<0xFF800000> : vector<16xf32>
    %80 = vector.multi_reduction <maximumf>, %79, %cst_23 [1] : vector<16x16xf32> to vector<16xf32>
    %81 = vector.shape_cast %80 : vector<16xf32> to vector<16x1xf32>
    %82 = vector.broadcast %81 : vector<16x1xf32> to vector<16x16xf32>
    %83 = arith.subf %79, %82 : vector<16x16xf32>
    %84 = math.exp %83 : vector<16x16xf32>
    %cst_24 = arith.constant dense<0.000000e+00> : vector<16xf32>
    %85 = vector.multi_reduction <add>, %84, %cst_24 [1] : vector<16x16xf32> to vector<16xf32>
    %86 = vector.shape_cast %85 : vector<16xf32> to vector<16x1xf32>
    %87 = tpu.reciprocal %86 {approx = true} : vector<16x1xf32> -> vector<16x1xf32>
    %88 = vector.broadcast %87 : vector<16x1xf32> to vector<16x16xf32>
    %89 = arith.mulf %84, %88 : vector<16x16xf32>
    %90 = arith.truncf %89 : vector<16x16xf32> to vector<16x16xbf16>
    %cst_25 = arith.constant dense<0.000000e+00> : vector<16x8xf32>
    %91 = tpu.matmul %90, %78, %cst_25 {dimension_numbers = #tpu.dot_dimension_numbers<[1], [0], [0], [1], [0, 0, 1, 1], [], []>} : vector<16x16xbf16>, vector<16x8xbf16>, vector<16x8xf32> -> vector<16x8xf32>
    %92 = tpu.concatenate %28, %49, %70, %91 in 1 : vector<16x8xf32>, vector<16x8xf32>, vector<16x8xf32>, vector<16x8xf32> -> vector<16x32xf32>
    %93 = arith.truncf %92 : vector<16x32xf32> to vector<16x32xbf16>
    %c0_26 = arith.constant 0 : index
    %c0_27 = arith.constant 0 : index
    %94 = vector.load %arg4[%c0_26, %c0_27] : memref<32x32xbf16, #tpu.memory_space<vmem>>, vector<32x32xbf16>
    %cst_28 = arith.constant dense<0.000000e+00> : vector<16x32xf32>
    %95 = tpu.matmul %93, %94, %cst_28 {dimension_numbers = #tpu.dot_dimension_numbers<[1], [0], [0], [1], [0, 0, 1, 1], [], []>} : vector<16x32xbf16>, vector<32x32xbf16>, vector<16x32xf32> -> vector<16x32xf32>
    %c0_29 = arith.constant 0 : index
    %c0_30 = arith.constant 0 : index
    %96 = vector.load %arg5[%c0_29, %c0_30] : memref<1x32xf32, #tpu.memory_space<vmem>>, vector<1x32xf32>
    %97 = vector.broadcast %96 : vector<1x32xf32> to vector<16x32xf32>
    %98 = arith.addf %95, %97 : vector<16x32xf32>
    %99 = arith.addf %1, %98 : vector<16x32xf32>
    %c0_31 = arith.constant 0 : index
    %c0_32 = arith.constant 0 : index
    %100 = vector.load %arg6[%c0_31, %c0_32] : memref<1x32xf32, #tpu.memory_space<vmem>>, vector<1x32xf32>
    %c0_33 = arith.constant 0 : index
    %c0_34 = arith.constant 0 : index
    %101 = vector.load %arg7[%c0_33, %c0_34] : memref<1x32xf32, #tpu.memory_space<vmem>>, vector<1x32xf32>
    %cst_35 = arith.constant dense<0.000000e+00> : vector<16xf32>
    %102 = vector.multi_reduction <add>, %99, %cst_35 [1] : vector<16x32xf32> to vector<16xf32>
    %103 = vector.shape_cast %102 : vector<16xf32> to vector<16x1xf32>
    %cst_36 = arith.constant 3.200000e+01 : f32
    %104 = vector.broadcast %cst_36 : f32 to vector<16x1xf32>
    %105 = arith.divf %103, %104 : vector<16x1xf32>
    %106 = vector.broadcast %105 : vector<16x1xf32> to vector<16x32xf32>
    %107 = arith.subf %99, %106 : vector<16x32xf32>
    %108 = arith.mulf %107, %107 : vector<16x32xf32>
    %cst_37 = arith.constant dense<0.000000e+00> : vector<16xf32>
    %109 = vector.multi_reduction <add>, %108, %cst_37 [1] : vector<16x32xf32> to vector<16xf32>
    %110 = vector.shape_cast %109 : vector<16xf32> to vector<16x1xf32>
    %cst_38 = arith.constant 3.200000e+01 : f32
    %111 = vector.broadcast %cst_38 : f32 to vector<16x1xf32>
    %112 = arith.divf %110, %111 : vector<16x1xf32>
    %cst_39 = arith.constant 9.99999974E-6 : f32
    %113 = vector.broadcast %cst_39 : f32 to vector<16x1xf32>
    %114 = arith.addf %112, %113 : vector<16x1xf32>
    %115 = math.rsqrt %114 : vector<16x1xf32>
    %116 = vector.broadcast %115 : vector<16x1xf32> to vector<16x32xf32>
    %117 = arith.mulf %107, %116 : vector<16x32xf32>
    %118 = vector.broadcast %100 : vector<1x32xf32> to vector<16x32xf32>
    %119 = arith.mulf %117, %118 : vector<16x32xf32>
    %120 = vector.broadcast %101 : vector<1x32xf32> to vector<16x32xf32>
    %121 = arith.addf %119, %120 : vector<16x32xf32>
    %122 = arith.truncf %121 : vector<16x32xf32> to vector<16x32xbf16>
    %c0_40 = arith.constant 0 : index
    %c0_41 = arith.constant 0 : index
    %123 = vector.load %arg8[%c0_40, %c0_41] : memref<32x64xbf16, #tpu.memory_space<vmem>>, vector<32x64xbf16>
    %cst_42 = arith.constant dense<0.000000e+00> : vector<16x64xf32>
    %124 = tpu.matmul %122, %123, %cst_42 {dimension_numbers = #tpu.dot_dimension_numbers<[1], [0], [0], [1], [0, 0, 1, 1], [], []>} : vector<16x32xbf16>, vector<32x64xbf16>, vector<16x64xf32> -> vector<16x64xf32>
    %c0_43 = arith.constant 0 : index
    %c0_44 = arith.constant 0 : index
    %125 = vector.load %arg9[%c0_43, %c0_44] : memref<1x64xf32, #tpu.memory_space<vmem>>, vector<1x64xf32>
    %126 = vector.broadcast %125 : vector<1x64xf32> to vector<16x64xf32>
    %127 = arith.addf %124, %126 : vector<16x64xf32>
    %cst_45 = arith.constant 5.000000e-01 : f32
    %128 = vector.broadcast %cst_45 : f32 to vector<16x64xf32>
    %129 = arith.mulf %128, %127 : vector<16x64xf32>
    %cst_46 = arith.constant 0.707106769 : f32
    %130 = vector.broadcast %cst_46 : f32 to vector<16x64xf32>
    %131 = arith.mulf %127, %130 : vector<16x64xf32>
    %cst_47 = arith.constant 0.000000e+00 : f32
    %132 = vector.broadcast %cst_47 : f32 to vector<16x64xf32>
    %133 = arith.cmpf oge, %131, %132 : vector<16x64xf32>
    %cst_48 = arith.constant 1.000000e+00 : f32
    %cst_49 = arith.constant -1.000000e+00 : f32
    %134 = vector.broadcast %cst_48 : f32 to vector<16x64xf32>
    %135 = vector.broadcast %cst_49 : f32 to vector<16x64xf32>
    %136 = arith.select %133, %134, %135 : vector<16x64xi1>, vector<16x64xf32>
    %137 = math.absf %131 : vector<16x64xf32>
    %cst_50 = arith.constant 0.327591091 : f32
    %138 = vector.broadcast %cst_50 : f32 to vector<16x64xf32>
    %139 = arith.mulf %138, %137 : vector<16x64xf32>
    %cst_51 = arith.constant 1.000000e+00 : f32
    %140 = vector.broadcast %cst_51 : f32 to vector<16x64xf32>
    %141 = arith.addf %140, %139 : vector<16x64xf32>
    %cst_52 = arith.constant 1.000000e+00 : f32
    %142 = vector.broadcast %cst_52 : f32 to vector<16x64xf32>
    %143 = arith.divf %142, %141 : vector<16x64xf32>
    %cst_53 = arith.constant 1.06140542 : f32
    %144 = vector.broadcast %cst_53 : f32 to vector<16x64xf32>
    %145 = arith.mulf %144, %143 : vector<16x64xf32>
    %cst_54 = arith.constant -1.45315206 : f32
    %146 = vector.broadcast %cst_54 : f32 to vector<16x64xf32>
    %147 = arith.addf %145, %146 : vector<16x64xf32>
    %148 = arith.mulf %147, %143 : vector<16x64xf32>
    %cst_55 = arith.constant 1.42141378 : f32
    %149 = vector.broadcast %cst_55 : f32 to vector<16x64xf32>
    %150 = arith.addf %148, %149 : vector<16x64xf32>
    %151 = arith.mulf %150, %143 : vector<16x64xf32>
    %cst_56 = arith.constant -0.284496725 : f32
    %152 = vector.broadcast %cst_56 : f32 to vector<16x64xf32>
    %153 = arith.addf %151, %152 : vector<16x64xf32>
    %154 = arith.mulf %153, %143 : vector<16x64xf32>
    %cst_57 = arith.constant 0.254829586 : f32
    %155 = vector.broadcast %cst_57 : f32 to vector<16x64xf32>
    %156 = arith.addf %154, %155 : vector<16x64xf32>
    %157 = arith.mulf %156, %143 : vector<16x64xf32>
    %cst_58 = arith.constant 0.000000e+00 : f32
    %158 = vector.broadcast %cst_58 : f32 to vector<16x64xf32>
    %159 = arith.subf %158, %137 : vector<16x64xf32>
    %160 = arith.mulf %159, %137 : vector<16x64xf32>
    %161 = math.exp %160 : vector<16x64xf32>
    %162 = arith.mulf %157, %161 : vector<16x64xf32>
    %cst_59 = arith.constant 1.000000e+00 : f32
    %163 = vector.broadcast %cst_59 : f32 to vector<16x64xf32>
    %164 = arith.subf %163, %162 : vector<16x64xf32>
    %165 = arith.mulf %136, %164 : vector<16x64xf32>
    %cst_60 = arith.constant 1.000000e+00 : f32
    %166 = vector.broadcast %cst_60 : f32 to vector<16x64xf32>
    %167 = arith.addf %166, %165 : vector<16x64xf32>
    %168 = arith.mulf %129, %167 : vector<16x64xf32>
    %169 = arith.truncf %168 : vector<16x64xf32> to vector<16x64xbf16>
    %c0_61 = arith.constant 0 : index
    %c0_62 = arith.constant 0 : index
    %170 = vector.load %arg10[%c0_61, %c0_62] : memref<64x32xbf16, #tpu.memory_space<vmem>>, vector<64x32xbf16>
    %cst_63 = arith.constant dense<0.000000e+00> : vector<16x32xf32>
    %171 = tpu.matmul %169, %170, %cst_63 {dimension_numbers = #tpu.dot_dimension_numbers<[1], [0], [0], [1], [0, 0, 1, 1], [], []>} : vector<16x64xbf16>, vector<64x32xbf16>, vector<16x32xf32> -> vector<16x32xf32>
    %c0_64 = arith.constant 0 : index
    %c0_65 = arith.constant 0 : index
    %172 = vector.load %arg11[%c0_64, %c0_65] : memref<1x32xf32, #tpu.memory_space<vmem>>, vector<1x32xf32>
    %173 = vector.broadcast %172 : vector<1x32xf32> to vector<16x32xf32>
    %174 = arith.addf %171, %173 : vector<16x32xf32>
    %175 = arith.addf %121, %174 : vector<16x32xf32>
    %c0_66 = arith.constant 0 : index
    %c0_67 = arith.constant 0 : index
    %176 = vector.load %arg12[%c0_66, %c0_67] : memref<1x32xf32, #tpu.memory_space<vmem>>, vector<1x32xf32>
    %c0_68 = arith.constant 0 : index
    %c0_69 = arith.constant 0 : index
    %177 = vector.load %arg13[%c0_68, %c0_69] : memref<1x32xf32, #tpu.memory_space<vmem>>, vector<1x32xf32>
    %cst_70 = arith.constant dense<0.000000e+00> : vector<16xf32>
    %178 = vector.multi_reduction <add>, %175, %cst_70 [1] : vector<16x32xf32> to vector<16xf32>
    %179 = vector.shape_cast %178 : vector<16xf32> to vector<16x1xf32>
    %cst_71 = arith.constant 3.200000e+01 : f32
    %180 = vector.broadcast %cst_71 : f32 to vector<16x1xf32>
    %181 = arith.divf %179, %180 : vector<16x1xf32>
    %182 = vector.broadcast %181 : vector<16x1xf32> to vector<16x32xf32>
    %183 = arith.subf %175, %182 : vector<16x32xf32>
    %184 = arith.mulf %183, %183 : vector<16x32xf32>
    %cst_72 = arith.constant dense<0.000000e+00> : vector<16xf32>
    %185 = vector.multi_reduction <add>, %184, %cst_72 [1] : vector<16x32xf32> to vector<16xf32>
    %186 = vector.shape_cast %185 : vector<16xf32> to vector<16x1xf32>
    %cst_73 = arith.constant 3.200000e+01 : f32
    %187 = vector.broadcast %cst_73 : f32 to vector<16x1xf32>
    %188 = arith.divf %186, %187 : vector<16x1xf32>
    %cst_74 = arith.constant 9.99999974E-6 : f32
    %189 = vector.broadcast %cst_74 : f32 to vector<16x1xf32>
    %190 = arith.addf %188, %189 : vector<16x1xf32>
    %191 = math.rsqrt %190 : vector<16x1xf32>
    %192 = vector.broadcast %191 : vector<16x1xf32> to vector<16x32xf32>
    %193 = arith.mulf %183, %192 : vector<16x32xf32>
    %194 = vector.broadcast %176 : vector<1x32xf32> to vector<16x32xf32>
    %195 = arith.mulf %193, %194 : vector<16x32xf32>
    %196 = vector.broadcast %177 : vector<1x32xf32> to vector<16x32xf32>
    %197 = arith.addf %195, %196 : vector<16x32xf32>
    %c0_75 = arith.constant 0 : index
    %c0_76 = arith.constant 0 : index
    %c0_77 = arith.constant 0 : index
    %198 = vector.load %arg14[%c0_75, %c0_76, %c0_77] : memref<1x16x32xf32, #tpu.memory_space<vmem>>, vector<1x16x32xf32>
    %199 = vector.shape_cast %198 : vector<1x16x32xf32> to vector<16x32xf32>
    %200 = vector.shape_cast %197 : vector<16x32xf32> to vector<1x16x32xf32>
    tpu.vector_store %arg14[%c0_75, %c0_76, %c0_77], %200 {strides = array<i32>} : memref<1x16x32xf32, #tpu.memory_space<vmem>>, vector<1x16x32xf32>,
    return
  }
  func.func @transform_0(%arg0: i32) -> (i32, i32, i32) {
    %c0_i32 = arith.constant 0 : i32
    %c0_i32_0 = arith.constant 0 : i32
    %c0_i32_1 = arith.constant 0 : i32
    return %arg0, %c0_i32, %c0_i32_0 : i32, i32, i32
  }
  func.func @transform_1(%arg0: i32) -> (i32, i32) {
    %c0_i32 = arith.constant 0 : i32
    %c0_i32_0 = arith.constant 0 : i32
    %c0_i32_1 = arith.constant 0 : i32
    return %c0_i32, %c0_i32_0 : i32, i32
  }
  func.func @transform_2(%arg0: i32) -> (i32, i32) {
    %c0_i32 = arith.constant 0 : i32
    %c0_i32_0 = arith.constant 0 : i32
    %c0_i32_1 = arith.constant 0 : i32
    return %c0_i32, %c0_i32_0 : i32, i32
  }
  func.func @transform_3(%arg0: i32) -> (i32, i32) {
    %c0_i32 = arith.constant 0 : i32
    %c0_i32_0 = arith.constant 0 : i32
    %c0_i32_1 = arith.constant 0 : i32
    return %c0_i32, %c0_i32_0 : i32, i32
  }
  func.func @transform_4(%arg0: i32) -> (i32, i32) {
    %c0_i32 = arith.constant 0 : i32
    %c0_i32_0 = arith.constant 0 : i32
    %c0_i32_1 = arith.constant 0 : i32
    return %c0_i32, %c0_i32_0 : i32, i32
  }
  func.func @transform_5(%arg0: i32) -> (i32, i32) {
    %c0_i32 = arith.constant 0 : i32
    %c0_i32_0 = arith.constant 0 : i32
    %c0_i32_1 = arith.constant 0 : i32
    return %c0_i32, %c0_i32_0 : i32, i32
  }
  func.func @transform_6(%arg0: i32) -> (i32, i32) {
    %c0_i32 = arith.constant 0 : i32
    %c0_i32_0 = arith.constant 0 : i32
    %c0_i32_1 = arith.constant 0 : i32
    return %c0_i32, %c0_i32_0 : i32, i32
  }
  func.func @transform_7(%arg0: i32) -> (i32, i32) {
    %c0_i32 = arith.constant 0 : i32
    %c0_i32_0 = arith.constant 0 : i32
    %c0_i32_1 = arith.constant 0 : i32
    return %c0_i32, %c0_i32_0 : i32, i32
  }
  func.func @transform_8(%arg0: i32) -> (i32, i32) {
    %c0_i32 = arith.constant 0 : i32
    %c0_i32_0 = arith.constant 0 : i32
    %c0_i32_1 = arith.constant 0 : i32
    return %c0_i32, %c0_i32_0 : i32, i32
  }
  func.func @transform_9(%arg0: i32) -> (i32, i32) {
    %c0_i32 = arith.constant 0 : i32
    %c0_i32_0 = arith.constant 0 : i32
    %c0_i32_1 = arith.constant 0 : i32
    return %c0_i32, %c0_i32_0 : i32, i32
  }
  func.func @transform_10(%arg0: i32) -> (i32, i32) {
    %c0_i32 = arith.constant 0 : i32
    %c0_i32_0 = arith.constant 0 : i32
    %c0_i32_1 = arith.constant 0 : i32
    return %c0_i32, %c0_i32_0 : i32, i32
  }
  func.func @transform_11(%arg0: i32) -> (i32, i32) {
    %c0_i32 = arith.constant 0 : i32
    %c0_i32_0 = arith.constant 0 : i32
    %c0_i32_1 = arith.constant 0 : i32
    return %c0_i32, %c0_i32_0 : i32, i32
  }
  func.func @transform_12(%arg0: i32) -> (i32, i32) {
    %c0_i32 = arith.constant 0 : i32
    %c0_i32_0 = arith.constant 0 : i32
    %c0_i32_1 = arith.constant 0 : i32
    return %c0_i32, %c0_i32_0 : i32, i32
  }
  func.func @transform_13(%arg0: i32) -> (i32, i32, i32) {
    %c0_i32 = arith.constant 0 : i32
    %c0_i32_0 = arith.constant 0 : i32
    %c0_i32_1 = arith.constant 0 : i32
    return %arg0, %c0_i32, %c0_i32_0 : i32, i32, i32
  }
}

</mosaic_0001>

<llo_original>
// kernel: sc_geo_layout_forward.5
$region0: #{sc_geo_layout_forward.5}
  #allocation0 [shape = 'u32[]', space=smem, size = 0x4, offset = 0x4, fixed_abs, tag = 'smem constant byte address 0x4 - core index']
  #allocation1 [shape = 'u32[144,128]{1,0:T(1,128)}', space=vmem, size = 0x12000, scoped, tag = 'internal scratch']
  %s0 = inlined_call_operand.vmem [shape: f32[2,16,32], index: 0, kind: input, shape index: {}]
  %s1 = inlined_call_operand.vmem [shape: f32[1,32], index: 1, kind: input, shape index: {}]
  %s2 = inlined_call_operand.vmem [shape: f32[1,32], index: 2, kind: input, shape index: {}]
  %s3 = inlined_call_operand.vmem [shape: bf16[32,8], index: 3, kind: input, shape index: {}]
  %s4 = inlined_call_operand.vmem [shape: f32[1,8], index: 4, kind: input, shape index: {}]
  %s5 = inlined_call_operand.vmem [shape: f32[2,16,8], index: 5, kind: output, shape index: {}]
  %s6 = sld [smem:[#allocation0]]
  $region53: #{sc_geo_layout_forward.5} parent=0
    _
  %s8 = ssub.s32 1, %s6
  %s9 = scalar_select 0, %s8, %s6
  loop: start=0, step=1, limit=4
  $region2: #{sc_geo_layout_forward.5} parent=0 // loop_pre_header
    _
  $region3: #{sc_geo_layout_forward.5} parent=0 // loop_header
    %s11 = sphi 0, %s15
    %p12 = scmp.ge.s32.totalorder %s11, 4
    %s21 = sphi 0, %s23
    %s24 = sphi 0, %s21
    %s25 = sphi 0, %s24
    %s41 = sphi 0, %s25
    %s45 = sphi 0, %s45
    %s47 = sphi 0, %s45
    %s48 = sphi 0, %s47
    %s62 = sphi 0, %s48
    %s66 = sphi 0, %s66
    %s68 = sphi 0, %s66
    %s69 = sphi 0, %s68
    %s83 = sphi 0, %s69
    %s87 = sphi 0, %s87
    %s89 = sphi 0, %s87
    %s90 = sphi 0, %s89
    %s104 = sphi 0, %s90
    %s108 = sphi 0, %s108
    %s110 = sphi 0, %s108
    %s111 = sphi 0, %s110
    %s125 = sphi 0, %s111
    %s131 = sphi 0, %s133
    %s134 = sphi 0, %s131
    %s135 = sphi 0, %s134
    %s151 = sphi 0, %s135
  $region4: #{sc_geo_layout_forward.5} parent=0 // loop_header_branch
    %14 = sbr.rel (%p12) target = $region8
  $region5: #{sc_geo_layout_forward.5} parent=0 // loop_body
    %s16 = ssub.s32 %s11, 1
    %s17 = ssub.s32 %s11, 2
    %s18 = sadd.s32 %s11, 1
    %s19 = ssub.s32 %s11, %s18
    %p20 = scmp.eq.s32.totalorder %s19, 0
    %s22 = sadd.s32 %s21, 1
    %s23 = scalar_select %p20, %s21, %s22
    %p26 = pneg %p20
    %p27 = scmp.eq.s32.totalorder %s11, 1
    %p28 = por %p26, %p27
    %p29 = scmp.ne.s32.totalorder %s21, %s24
    %p30 = scmp.eq.s32.totalorder %s11, 0
    %p31 = por %p29, %p30
    %p32 = scmp.ne.s32.totalorder %s21, %s24
    %p33 = scmp.eq.s32.totalorder %s16, 1
    %p34 = por %p32, %p33
    %p35 = scmp.ne.s32.totalorder %s24, %s25
    %p36 = scmp.eq.s32.totalorder %s16, 0
    %p37 = por %p35, %p36
    %p38 = scmp.ne.s32.totalorder %s24, %s25
    %p39 = scmp.eq.s32.totalorder %s17, 1
    %p40 = por %p38, %p39
    %p42 = scmp.ne.s32.totalorder %s25, %s41
    %p43 = scmp.eq.s32.totalorder %s17, 0
    %p44 = por %p42, %p43
    %s46 = sadd.s32 %s45, 1
    %p49 = scmp.eq.s32.totalorder %s11, 1
    %p50 = scmp.ne.s32.totalorder %s45, %s47
    %p51 = scmp.eq.s32.totalorder %s11, 0
    %p52 = por %p50, %p51
    %p53 = scmp.ne.s32.totalorder %s45, %s47
    %p54 = scmp.eq.s32.totalorder %s16, 1
    %p55 = por %p53, %p54
    %p56 = scmp.ne.s32.totalorder %s47, %s48
    %p57 = scmp.eq.s32.totalorder %s16, 0
    %p58 = por %p56, %p57
    %p59 = scmp.ne.s32.totalorder %s47, %s48
    %p60 = scmp.eq.s32.totalorder %s17, 1
    %p61 = por %p59, %p60
    %p63 = scmp.ne.s32.totalorder %s48, %s62
    %p64 = scmp.eq.s32.totalorder %s17, 0
    %p65 = por %p63, %p64
    %s67 = sadd.s32 %s66, 1
    %p70 = scmp.eq.s32.totalorder %s11, 1
    %p71 = scmp.ne.s32.totalorder %s66, %s68
    %p72 = scmp.eq.s32.totalorder %s11, 0
    %p73 = por %p71, %p72
    %p74 = scmp.ne.s32.totalorder %s66, %s68
    %p75 = scmp.eq.s32.totalorder %s16, 1
    %p76 = por %p74, %p75
    %p77 = scmp.ne.s32.totalorder %s68, %s69
    %p78 = scmp.eq.s32.totalorder %s16, 0
    %p79 = por %p77, %p78
    %p80 = scmp.ne.s32.totalorder %s68, %s69
    %p81 = scmp.eq.s32.totalorder %s17, 1
    %p82 = por %p80, %p81
    %p84 = scmp.ne.s32.totalorder %s69, %s83
    %p85 = scmp.eq.s32.totalorder %s17, 0
    %p86 = por %p84, %p85
    %s88 = sadd.s32 %s87, 1
    %p91 = scmp.eq.s32.totalorder %s11, 1
    %p92 = scmp.ne.s32.totalorder %s87, %s89
    %p93 = scmp.eq.s32.totalorder %s11, 0
    %p94 = por %p92, %p93
    %p95 = scmp.ne.s32.totalorder %s87, %s89
    %p96 = scmp.eq.s32.totalorder %s16, 1
    %p97 = por %p95, %p96
    %p98 = scmp.ne.s32.totalorder %s89, %s90
    %p99 = scmp.eq.s32.totalorder %s16, 0
    %p100 = por %p98, %p99
    %p101 = scmp.ne.s32.totalorder %s89, %s90
    %p102 = scmp.eq.s32.totalorder %s17, 1
    %p103 = por %p101, %p102
    %p105 = scmp.ne.s32.totalorder %s90, %s104
    %p106 = scmp.eq.s32.totalorder %s17, 0
    %p107 = por %p105, %p106
    %s109 = sadd.s32 %s108, 1
    %p112 = scmp.eq.s32.totalorder %s11, 1
    %p113 = scmp.ne.s32.totalorder %s108, %s110
    %p114 = scmp.eq.s32.totalorder %s11, 0
    %p115 = por %p113, %p114
    %p116 = scmp.ne.s32.totalorder %s108, %s110
    %p117 = scmp.eq.s32.totalorder %s16, 1
    %p118 = por %p116, %p117
    %p119 = scmp.ne.s32.totalorder %s110, %s111
    %p120 = scmp.eq.s32.totalorder %s16, 0
    %p121 = por %p119, %p120
    %p122 = scmp.ne.s32.totalorder %s110, %s111
    %p123 = scmp.eq.s32.totalorder %s17, 1
    %p124 = por %p122, %p123
    %p126 = scmp.ne.s32.totalorder %s111, %s125
    %p127 = scmp.eq.s32.totalorder %s17, 0
    %p128 = por %p126, %p127
    %s129 = ssub.s32 %s11, %s18
    %p130 = scmp.eq.s32.totalorder %s129, 0
    %s132 = sadd.s32 %s131, 1
    %s133 = scalar_select %p130, %s131, %s132
    %p136 = pneg %p130
    %p137 = scmp.eq.s32.totalorder %s11, 1
    %p138 = por %p136, %p137
    %p139 = scmp.ne.s32.totalorder %s131, %s134
    %p140 = scmp.eq.s32.totalorder %s11, 0
    %p141 = por %p139, %p140
    %p142 = scmp.ne.s32.totalorder %s131, %s134
    %p143 = scmp.eq.s32.totalorder %s16, 1
    %p144 = por %p142, %p143
    %p145 = scmp.ne.s32.totalorder %s134, %s135
    %p146 = scmp.eq.s32.totalorder %s16, 0
    %p147 = por %p145, %p146
    %p148 = scmp.ne.s32.totalorder %s134, %s135
    %p149 = scmp.eq.s32.totalorder %s17, 1
    %p150 = por %p148, %p149
    %p152 = scmp.ne.s32.totalorder %s135, %s151
    %p153 = scmp.eq.s32.totalorder %s17, 0
    %p154 = por %p152, %p153
    %p155 = scmp.le.s32.totalorder 1, %s11
    %p156 = scmp.lt.s32.totalorder %s11, 3
    %p157 = pnand %p155, %p156
    %p158 = pneg %p157
    // Predicated region
    $region9: #{sc_geo_layout_forward.5} parent=5 // pred_check
      _
    $region10: #{sc_geo_layout_forward.5} parent=5 // pred_check_branch
      %160 = sbr.rel (%p157) target = $region12
    $region11: #{sc_geo_layout_forward.5} parent=5 // pred_region
      %s161 = ssub.s32 %s11, 1
      // Predicated region
      $region13: #{sc_geo_layout_forward.5} parent=11 // pred_check
        %p162 = pneg %p58
      $region14: #{sc_geo_layout_forward.5} parent=11 // pred_check_branch
        %164 = sbr.rel (%p162) target = $region16
      $region15: #{sc_geo_layout_forward.5} parent=11 // pred_region
        _
      $region16: #{sc_geo_layout_forward.5} parent=11 // pred_fallthru
        _
      // Predicated region
      $region17: #{sc_geo_layout_forward.5} parent=11 // pred_check
        %p165 = pneg %p79
      $region18: #{sc_geo_layout_forward.5} parent=11 // pred_check_branch
        %167 = sbr.rel (%p165) target = $region20
      $region19: #{sc_geo_layout_forward.5} parent=11 // pred_region
        _
      $region20: #{sc_geo_layout_forward.5} parent=11 // pred_fallthru
        _
      // Predicated region
      $region21: #{sc_geo_layout_forward.5} parent=11 // pred_check
        %p168 = pneg %p100
      $region22: #{sc_geo_layout_forward.5} parent=11 // pred_check_branch
        %170 = sbr.rel (%p168) target = $region24
      $region23: #{sc_geo_layout_forward.5} parent=11 // pred_region
        _
      $region24: #{sc_geo_layout_forward.5} parent=11 // pred_fallthru
        _
      // Predicated region
      $region25: #{sc_geo_layout_forward.5} parent=11 // pred_check
        %p171 = pneg %p121
      $region26: #{sc_geo_layout_forward.5} parent=11 // pred_check_branch
        %173 = sbr.rel (%p171) target = $region28
      $region27: #{sc_geo_layout_forward.5} parent=11 // pred_region
        _
      $region28: #{sc_geo_layout_forward.5} parent=11 // pred_fallthru
        _
    $region12: #{sc_geo_layout_forward.5} parent=5 // pred_fallthru
      _
    %p174 = scmp.lt.s32.totalorder %s11, 2
    // Predicated region
    $region29: #{sc_geo_layout_forward.5} parent=5 // pred_check
      %p175 = pneg %p174
    $region30: #{sc_geo_layout_forward.5} parent=5 // pred_check_branch
      %177 = sbr.rel (%p175) target = $region32
    $region31: #{sc_geo_layout_forward.5} parent=5 // pred_region
      // Predicated region
      $region33: #{sc_geo_layout_forward.5} parent=31 // pred_check
        %p178 = pneg %p31
      $region34: #{sc_geo_layout_forward.5} parent=31 // pred_check_branch
        %180 = sbr.rel (%p178) target = $region36
      $region35: #{sc_geo_layout_forward.5} parent=31 // pred_region
        %p181 = scmp.lt.s32.totalorder %s11, 1
        %s182 = scalar_select %p181, %s11, 1
        %s183 = smul.addr %s182, 2
        %s184 = smul.addr %s183, 8
        %s185 = scalar_lea.vmem %s0, %s184
      $region36: #{sc_geo_layout_forward.5} parent=31 // pred_fallthru
        _
    $region32: #{sc_geo_layout_forward.5} parent=5 // pred_fallthru
      _
    %p186 = scmp.le.s32.totalorder 1, %s11
    %p187 = scmp.lt.s32.totalorder %s11, 3
    %p188 = pnand %p186, %p187
    %p189 = pneg %p188
    // Predicated region
    $region37: #{sc_geo_layout_forward.5} parent=5 // pred_check
      _
    $region38: #{sc_geo_layout_forward.5} parent=5 // pred_check_branch
      %191 = sbr.rel (%p188) target = $region40
    $region39: #{sc_geo_layout_forward.5} parent=5 // pred_region
      %s192 = ssub.s32 %s11, 1
      %p193 = scmp.lt.s32.totalorder %s16, 1
      %s194 = scalar_select %p193, %s16, 1
      %s195 = smul.addr %s194, 2
      %s196 = smul.addr %s195, 8
      %s197 = scalar_lea.vmem %s0, %s196
      %p198 = pneg %p37
      %p199 = pneg %p34
      %p200 = pneg %p58
      %p201 = pneg %p55
      %p202 = pneg %p79
      %p203 = pneg %p76
      %p204 = pneg %p100
      %p205 = pneg %p97
      %p206 = pneg %p121
      %p207 = pneg %p118
      %p208 = pneg %p147
      %p209 = pneg %p144
      %p210 = scmp.lt.s32.totalorder %s16, 1
      %s211 = scalar_select %p210, %s16, 1
      %s212 = smul.addr %s211, 2
      %s213 = smul.addr %s212, 8
      %s214 = scalar_lea.vmem %s5, %s213
      %p215 = scmp.lt.s32.totalorder %s16, 1
      %s216 = scalar_select %p215, %s16, 1
      %s217 = smul.addr %s216, 2
      %s218 = smul.addr %s217, 8
      %s219 = scalar_lea.vmem %s0, %s218
      %p220 = scmp.lt.s32.totalorder %s16, 1
      %s221 = scalar_select %p220, %s16, 1
      %s222 = smul.addr %s221, 2
      %s223 = smul.addr %s222, 8
      %s224 = scalar_lea.vmem %s5, %s223
      %v226 = vld [vmem:[%s219] sm:$0xff]
      %v227 = vld [vmem:[%s219 + $0x8] sm:$0xff]
      %v228 = vld [vmem:[%s1] sm:$0x1]
      %v229 = vld [vmem:[%s2] sm:$0x1]
      %vm230 = vcmask 261120
      %v231 = vsel %vm230, %v226, 0.0
      %232 = vadd.xlane.f32.xlu0 %v231
      %v233 = vpop.xlane.xlu0 %232
      %v234 = vsel %vm230, %v227, 0.0
      %235 = vadd.xlane.f32.xlu0 %v234
      %v236 = vpop.xlane.xlu0 %235
      %v237 = vrcp.pop 32.0
      %v238 = vmul.f32 %v233, %v237
      %v239 = vmul.f32 %v236, %v237
      %v240 = vsub.f32 %v226, %v238
      %v241 = vsub.f32 %v227, %v239
      %v242 = vmul.f32 %v240, %v240
      %v243 = vmul.f32 %v241, %v241
      %v244 = vsel %vm230, %v242, 0.0
      %245 = vadd.xlane.f32.xlu0 %v244
      %v246 = vpop.xlane.xlu0 %245
      %v247 = vsel %vm230, %v243, 0.0
      %248 = vadd.xlane.f32.xlu0 %v247
      %v249 = vpop.xlane.xlu0 %248
      %v250 = vmul.f32 %v246, %v237
      %v251 = vmul.f32 %v249, %v237
      %v252 = vadd.f32 %v250, 1e-05
      %v253 = vadd.f32 %v251, 1e-05
      %v254 = vrsqrt.pop %v252
      %v255 = vrsqrt.pop %v253
      %v256 = vmul.f32 %v240, %v254
      %v257 = vmul.f32 %v241, %v255
      %v259 = vlaneseq
      %v260 = vshrl.u32 %v259, 7
      %v261 = vsub.s32 0, %v260
      %v262 = vrot.slane %v228, %v261
      %v264 = vmul.f32 %v256, %v262
      %v265 = vmul.f32 %v257, %v262
      %v267 = vlaneseq
      %v268 = vshrl.u32 %v267, 7
      %v269 = vsub.s32 0, %v268
      %v270 = vrot.slane %v229, %v269
      %v272 = vadd.f32 %v264, %v270
      %v273 = vadd.f32 %v265, %v270
      %v274 = vpack.c.bf16 %v273, %v272
      %v275 = vld [vmem:[%s3] sm:$0xf]
      %v276 = vld [vmem:[%s3 + $0x4] sm:$0xf]
      %v277 = vld [vmem:[%s3 + $0x8] sm:$0xf]
      %v278 = vld [vmem:[%s3 + $0xc] sm:$0xf]
      %v279 = vld [vmem:[%s4] sm:$0x1]
      %v281 = vlaneseq
      %v282 = vshrl.u32 %v281, 7
      %v283 = vsub.s32 0, %v282
      %v284 = vrot.slane %v279, %v283
      %v290 = vunpack.c.l.b16 %v275
      %v291 = vunpack.c.l.b16 %v276
      %v292 = vunpack.c.l.b16 %v277
      %v293 = vunpack.c.l.b16 %v278
      %v294 = vpack.c.b16 %v291, %v290
      %v295 = vpack.c.b16 %v293, %v292
      %v299 = vsel %vm230, %v274, 0
      %301 = vmatprep.subr.bf16.mxu0 0
      %302 = vmatpush1.bf16.msra.mxu0 %v294
      %303 = vmatprep.subr.bf16.mxu0 0
      %304 = vmatpush1.bf16.msra.mxu0 %v295
      %305 = vmatprep.subr.bf16.mxu0 0
      %306 = vmatpush1.bf16.msra.mxu0 0
      %307 = vmatprep.subr.bf16.mxu0 0
      %308 = vmatpush1.bf16.msra.mxu0 0
      %309 = vmatprep.subr.bf16.mxu0 0
      %310 = vmatpush1.bf16.msra.mxu0 0
      %311 = vmatprep.subr.bf16.mxu0 0
      %312 = vmatpush1.bf16.msra.mxu0 0
      %313 = vmatprep.subr.bf16.mxu0 0
      %314 = vmatpush1.bf16.msra.mxu0 0
      %315 = vmatprep.subr.bf16.mxu0 0
      %316 = vmatpush1.bf16.msra.mxu0 0
      %317 = vmatprep.subr.bf16.mxu0 0
      %318 = vmatpush1.bf16.msra.mxu0 0
      %319 = vmatprep.subr.bf16.mxu0 0
      %320 = vmatpush1.bf16.msra.mxu0 0
      %321 = vmatprep.subr.bf16.mxu0 0
      %322 = vmatpush1.bf16.msra.mxu0 0
      %323 = vmatprep.subr.bf16.mxu0 0
      %324 = vmatpush1.bf16.msra.mxu0 0
      %325 = vmatprep.subr.bf16.mxu0 0
      %326 = vmatpush1.bf16.msra.mxu0 0
      %327 = vmatprep.subr.bf16.mxu0 0
      %328 = vmatpush1.bf16.msra.mxu0 0
      %329 = vmatprep.subr.bf16.mxu0 0
      %330 = vmatpush1.bf16.msra.mxu0 0
      %331 = vmatprep.subr.bf16.mxu0 0
      %332 = vmatpush1.bf16.msra.mxu0 0
      %333 = vmatprep.mubr.bf16.mxu0 0
      %334 = vmatmul.mubr.bf16.gmra.mrb[0].mxu0 %v299
      %v335 = vpop.f32.mrb[0].mxu0
      %v336 = vadd.f32 %v284, %v335
      %v337 = vpop.f32.mrb[0].mxu0
      %v338 = vpop.f32.mrb[0].mxu0
      %v339 = vadd.f32 %v284, %v338
      %v340 = vpop.f32.mrb[0].mxu0
      %341 = vdwg.mxu0
      %v342 = vxor.u32 %v336, 2147483648
      %v343 = vxor.u32 %v339, 2147483648
      %v344 = vmul.f32 %v342, 1.442695
      %v345 = vpow.pop %v344
      %v346 = vmul.f32 %v343, 1.442695
      %v347 = vpow.pop %v346
      %v348 = vadd.f32 %v345, 1.0
      %v349 = vadd.f32 %v347, 1.0
      %v350 = vrcp.pop %v348
      %v351 = vmul.f32 1.0, %v350
      %v352 = vrcp.pop %v349
      %v353 = vmul.f32 1.0, %v352
      %vm354 = vcmask 64512
      %355 = vst.msk [vmem:[%s224] sm:$0xff] %vm354, %v351
      %356 = vst.msk [vmem:[%s224 + $0x8] sm:$0xff] %vm354, %v353
      %p357 = scmp.lt.s32.totalorder %s16, 1
      %s358 = scalar_select %p357, %s16, 1
      %s359 = smul.addr %s358, 2
      %s360 = smul.addr %s359, 8
      %s361 = scalar_lea.vmem %s5, %s360
      // Predicated region
      $region41: #{sc_geo_layout_forward.5} parent=39 // pred_check
        %p362 = pneg %p144
      $region42: #{sc_geo_layout_forward.5} parent=39 // pred_check_branch
        %364 = sbr.rel (%p362) target = $region44
      $region43: #{sc_geo_layout_forward.5} parent=39 // pred_region
        _
      $region44: #{sc_geo_layout_forward.5} parent=39 // pred_fallthru
        _
    $region40: #{sc_geo_layout_forward.5} parent=5 // pred_fallthru
      _
    %p365 = scmp.le.s32.totalorder 2, %s11
    // Predicated region
    $region45: #{sc_geo_layout_forward.5} parent=5 // pred_check
      %p366 = pneg %p365
    $region46: #{sc_geo_layout_forward.5} parent=5 // pred_check_branch
      %368 = sbr.rel (%p366) target = $region48
    $region47: #{sc_geo_layout_forward.5} parent=5 // pred_region
      %s369 = ssub.s32 %s11, 2
      // Predicated region
      $region49: #{sc_geo_layout_forward.5} parent=47 // pred_check
        %p370 = pneg %p150
      $region50: #{sc_geo_layout_forward.5} parent=47 // pred_check_branch
        %372 = sbr.rel (%p370) target = $region52
      $region51: #{sc_geo_layout_forward.5} parent=47 // pred_region
        %p373 = scmp.lt.s32.totalorder %s17, 1
        %s374 = scalar_select %p373, %s17, 1
        %s375 = smul.addr %s374, 2
        %s376 = smul.addr %s375, 8
        %s377 = scalar_lea.vmem %s5, %s376
      $region52: #{sc_geo_layout_forward.5} parent=47 // pred_fallthru
        _
    $region48: #{sc_geo_layout_forward.5} parent=5 // pred_fallthru
      _
  $region6: #{sc_geo_layout_forward.5} parent=0 // loop_footer
    %s15 = sadd.s32 1, %s11
  $region7: #{sc_geo_layout_forward.5} parent=0 // loop_footer_branch
    %10 = sbr.rel target = $region3
  $region8: #{sc_geo_layout_forward.5} parent=0 // loop_exit
    _

// kernel: sc_geo_layout_forward.3
$region0: #{sc_geo_layout_forward.3}
  #allocation0 [shape = 'u32[]', space=smem, size = 0x4, offset = 0x4, fixed_abs, tag = 'smem constant byte address 0x4 - core index']
  #allocation1 [shape = 'u32[144,128]{1,0:T(1,128)}', space=vmem, size = 0x12000, scoped, tag = 'internal scratch']
  %s0 = inlined_call_operand.vmem [shape: f32[2,16,32], index: 0, kind: input, shape index: {}]
  %s1 = inlined_call_operand.vmem [shape: bf16[32,96], index: 1, kind: input, shape index: {}]
  %s2 = inlined_call_operand.vmem [shape: f32[1,96], index: 2, kind: input, shape index: {}]
  %s3 = inlined_call_operand.vmem [shape: bf16[32,32], index: 3, kind: input, shape index: {}]
  %s4 = inlined_call_operand.vmem [shape: f32[1,32], index: 4, kind: input, shape index: {}, may-alias: {4,6,10,12}]
  %s5 = inlined_call_operand.vmem [shape: f32[1,32], index: 5, kind: input, shape index: {}, may-alias: {5,11}]
  %s6 = inlined_call_operand.vmem [shape: f32[1,32], index: 6, kind: input, shape index: {}, may-alias: {4,6,10,12}]
  %s7 = inlined_call_operand.vmem [shape: bf16[32,64], index: 7, kind: input, shape index: {}]
  %s8 = inlined_call_operand.vmem [shape: f32[1,64], index: 8, kind: input, shape index: {}]
  %s9 = inlined_call_operand.vmem [shape: bf16[64,32], index: 9, kind: input, shape index: {}]
  %s10 = inlined_call_operand.vmem [shape: f32[1,32], index: 10, kind: input, shape index: {}, may-alias: {4,6,10,12}]
  %s11 = inlined_call_operand.vmem [shape: f32[1,32], index: 11, kind: input, shape index: {}, may-alias: {5,11}]
  %s12 = inlined_call_operand.vmem [shape: f32[1,32], index: 12, kind: input, shape index: {}, may-alias: {4,6,10,12}]
  %s13 = inlined_call_operand.vmem [shape: f32[2,16,32], index: 13, kind: output, shape index: {}]
  %s14 = sld [smem:[#allocation0]]
  $region85: #{sc_geo_layout_forward.3} parent=0
    _
  %s16 = ssub.s32 1, %s14
  %s17 = scalar_select 0, %s16, %s14
  loop: start=0, step=1, limit=4
  $region2: #{sc_geo_layout_forward.3} parent=0 // loop_pre_header
    _
  $region3: #{sc_geo_layout_forward.3} parent=0 // loop_header
    %s19 = sphi 0, %s23
    %p20 = scmp.ge.s32.totalorder %s19, 4
    %s29 = sphi 0, %s31
    %s32 = sphi 0, %s29
    %s33 = sphi 0, %s32
    %s49 = sphi 0, %s33
    %s53 = sphi 0, %s53
    %s55 = sphi 0, %s53
    %s56 = sphi 0, %s55
    %s70 = sphi 0, %s56
    %s74 = sphi 0, %s74
    %s76 = sphi 0, %s74
    %s77 = sphi 0, %s76
    %s91 = sphi 0, %s77
    %s95 = sphi 0, %s95
    %s97 = sphi 0, %s95
    %s98 = sphi 0, %s97
    %s112 = sphi 0, %s98
    %s116 = sphi 0, %s116
    %s118 = sphi 0, %s116
    %s119 = sphi 0, %s118
    %s133 = sphi 0, %s119
    %s137 = sphi 0, %s137
    %s139 = sphi 0, %s137
    %s140 = sphi 0, %s139
    %s154 = sphi 0, %s140
    %s158 = sphi 0, %s158
    %s160 = sphi 0, %s158
    %s161 = sphi 0, %s160
    %s175 = sphi 0, %s161
    %s179 = sphi 0, %s179
    %s181 = sphi 0, %s179
    %s182 = sphi 0, %s181
    %s196 = sphi 0, %s182
    %s200 = sphi 0, %s200
    %s202 = sphi 0, %s200
    %s203 = sphi 0, %s202
    %s217 = sphi 0, %s203
    %s221 = sphi 0, %s221
    %s223 = sphi 0, %s221
    %s224 = sphi 0, %s223
    %s238 = sphi 0, %s224
    %s242 = sphi 0, %s242
    %s244 = sphi 0, %s242
    %s245 = sphi 0, %s244
    %s259 = sphi 0, %s245
    %s263 = sphi 0, %s263
    %s265 = sphi 0, %s263
    %s266 = sphi 0, %s265
    %s280 = sphi 0, %s266
    %s284 = sphi 0, %s284
    %s286 = sphi 0, %s284
    %s287 = sphi 0, %s286
    %s301 = sphi 0, %s287
    %s307 = sphi 0, %s309
    %s310 = sphi 0, %s307
    %s311 = sphi 0, %s310
    %s327 = sphi 0, %s311
  $region4: #{sc_geo_layout_forward.3} parent=0 // loop_header_branch
    %22 = sbr.rel (%p20) target = $region8
  $region5: #{sc_geo_layout_forward.3} parent=0 // loop_body
    %s24 = ssub.s32 %s19, 1
    %s25 = ssub.s32 %s19, 2
    %s26 = sadd.s32 %s19, 1
    %s27 = ssub.s32 %s19, %s26
    %p28 = scmp.eq.s32.totalorder %s27, 0
    %s30 = sadd.s32 %s29, 1
    %s31 = scalar_select %p28, %s29, %s30
    %p34 = pneg %p28
    %p35 = scmp.eq.s32.totalorder %s19, 1
    %p36 = por %p34, %p35
    %p37 = scmp.ne.s32.totalorder %s29, %s32
    %p38 = scmp.eq.s32.totalorder %s19, 0
    %p39 = por %p37, %p38
    %p40 = scmp.ne.s32.totalorder %s29, %s32
    %p41 = scmp.eq.s32.totalorder %s24, 1
    %p42 = por %p40, %p41
    %p43 = scmp.ne.s32.totalorder %s32, %s33
    %p44 = scmp.eq.s32.totalorder %s24, 0
    %p45 = por %p43, %p44
    %p46 = scmp.ne.s32.totalorder %s32, %s33
    %p47 = scmp.eq.s32.totalorder %s25, 1
    %p48 = por %p46, %p47
    %p50 = scmp.ne.s32.totalorder %s33, %s49
    %p51 = scmp.eq.s32.totalorder %s25, 0
    %p52 = por %p50, %p51
    %s54 = sadd.s32 %s53, 1
    %p57 = scmp.eq.s32.totalorder %s19, 1
    %p58 = scmp.ne.s32.totalorder %s53, %s55
    %p59 = scmp.eq.s32.totalorder %s19, 0
    %p60 = por %p58, %p59
    %p61 = scmp.ne.s32.totalorder %s53, %s55
    %p62 = scmp.eq.s32.totalorder %s24, 1
    %p63 = por %p61, %p62
    %p64 = scmp.ne.s32.totalorder %s55, %s56
    %p65 = scmp.eq.s32.totalorder %s24, 0
    %p66 = por %p64, %p65
    %p67 = scmp.ne.s32.totalorder %s55, %s56
    %p68 = scmp.eq.s32.totalorder %s25, 1
    %p69 = por %p67, %p68
    %p71 = scmp.ne.s32.totalorder %s56, %s70
    %p72 = scmp.eq.s32.totalorder %s25, 0
    %p73 = por %p71, %p72
    %s75 = sadd.s32 %s74, 1
    %p78 = scmp.eq.s32.totalorder %s19, 1
    %p79 = scmp.ne.s32.totalorder %s74, %s76
    %p80 = scmp.eq.s32.totalorder %s19, 0
    %p81 = por %p79, %p80
    %p82 = scmp.ne.s32.totalorder %s74, %s76
    %p83 = scmp.eq.s32.totalorder %s24, 1
    %p84 = por %p82, %p83
    %p85 = scmp.ne.s32.totalorder %s76, %s77
    %p86 = scmp.eq.s32.totalorder %s24, 0
    %p87 = por %p85, %p86
    %p88 = scmp.ne.s32.totalorder %s76, %s77
    %p89 = scmp.eq.s32.totalorder %s25, 1
    %p90 = por %p88, %p89
    %p92 = scmp.ne.s32.totalorder %s77, %s91
    %p93 = scmp.eq.s32.totalorder %s25, 0
    %p94 = por %p92, %p93
    %s96 = sadd.s32 %s95, 1
    %p99 = scmp.eq.s32.totalorder %s19, 1
    %p100 = scmp.ne.s32.totalorder %s95, %s97
    %p101 = scmp.eq.s32.totalorder %s19, 0
    %p102 = por %p100, %p101
    %p103 = scmp.ne.s32.totalorder %s95, %s97
    %p104 = scmp.eq.s32.totalorder %s24, 1
    %p105 = por %p103, %p104
    %p106 = scmp.ne.s32.totalorder %s97, %s98
    %p107 = scmp.eq.s32.totalorder %s24, 0
    %p108 = por %p106, %p107
    %p109 = scmp.ne.s32.totalorder %s97, %s98
    %p110 = scmp.eq.s32.totalorder %s25, 1
    %p111 = por %p109, %p110
    %p113 = scmp.ne.s32.totalorder %s98, %s112
    %p114 = scmp.eq.s32.totalorder %s25, 0
    %p115 = por %p113, %p114
    %s117 = sadd.s32 %s116, 1
    %p120 = scmp.eq.s32.totalorder %s19, 1
    %p121 = scmp.ne.s32.totalorder %s116, %s118
    %p122 = scmp.eq.s32.totalorder %s19, 0
    %p123 = por %p121, %p122
    %p124 = scmp.ne.s32.totalorder %s116, %s118
    %p125 = scmp.eq.s32.totalorder %s24, 1
    %p126 = por %p124, %p125
    %p127 = scmp.ne.s32.totalorder %s118, %s119
    %p128 = scmp.eq.s32.totalorder %s24, 0
    %p129 = por %p127, %p128
    %p130 = scmp.ne.s32.totalorder %s118, %s119
    %p131 = scmp.eq.s32.totalorder %s25, 1
    %p132 = por %p130, %p131
    %p134 = scmp.ne.s32.totalorder %s119, %s133
    %p135 = scmp.eq.s32.totalorder %s25, 0
    %p136 = por %p134, %p135
    %s138 = sadd.s32 %s137, 1
    %p141 = scmp.eq.s32.totalorder %s19, 1
    %p142 = scmp.ne.s32.totalorder %s137, %s139
    %p143 = scmp.eq.s32.totalorder %s19, 0
    %p144 = por %p142, %p143
    %p145 = scmp.ne.s32.totalorder %s137, %s139
    %p146 = scmp.eq.s32.totalorder %s24, 1
    %p147 = por %p145, %p146
    %p148 = scmp.ne.s32.totalorder %s139, %s140
    %p149 = scmp.eq.s32.totalorder %s24, 0
    %p150 = por %p148, %p149
    %p151 = scmp.ne.s32.totalorder %s139, %s140
    %p152 = scmp.eq.s32.totalorder %s25, 1
    %p153 = por %p151, %p152
    %p155 = scmp.ne.s32.totalorder %s140, %s154
    %p156 = scmp.eq.s32.totalorder %s25, 0
    %p157 = por %p155, %p156
    %s159 = sadd.s32 %s158, 1
    %p162 = scmp.eq.s32.totalorder %s19, 1
    %p163 = scmp.ne.s32.totalorder %s158, %s160
    %p164 = scmp.eq.s32.totalorder %s19, 0
    %p165 = por %p163, %p164
    %p166 = scmp.ne.s32.totalorder %s158, %s160
    %p167 = scmp.eq.s32.totalorder %s24, 1
    %p168 = por %p166, %p167
    %p169 = scmp.ne.s32.totalorder %s160, %s161
    %p170 = scmp.eq.s32.totalorder %s24, 0
    %p171 = por %p169, %p170
    %p172 = scmp.ne.s32.totalorder %s160, %s161
    %p173 = scmp.eq.s32.totalorder %s25, 1
    %p174 = por %p172, %p173
    %p176 = scmp.ne.s32.totalorder %s161, %s175
    %p177 = scmp.eq.s32.totalorder %s25, 0
    %p178 = por %p176, %p177
    %s180 = sadd.s32 %s179, 1
    %p183 = scmp.eq.s32.totalorder %s19, 1
    %p184 = scmp.ne.s32.totalorder %s179, %s181
    %p185 = scmp.eq.s32.totalorder %s19, 0
    %p186 = por %p184, %p185
    %p187 = scmp.ne.s32.totalorder %s179, %s181
    %p188 = scmp.eq.s32.totalorder %s24, 1
    %p189 = por %p187, %p188
    %p190 = scmp.ne.s32.totalorder %s181, %s182
    %p191 = scmp.eq.s32.totalorder %s24, 0
    %p192 = por %p190, %p191
    %p193 = scmp.ne.s32.totalorder %s181, %s182
    %p194 = scmp.eq.s32.totalorder %s25, 1
    %p195 = por %p193, %p194
    %p197 = scmp.ne.s32.totalorder %s182, %s196
    %p198 = scmp.eq.s32.totalorder %s25, 0
    %p199 = por %p197, %p198
    %s201 = sadd.s32 %s200, 1
    %p204 = scmp.eq.s32.totalorder %s19, 1
    %p205 = scmp.ne.s32.totalorder %s200, %s202
    %p206 = scmp.eq.s32.totalorder %s19, 0
    %p207 = por %p205, %p206
    %p208 = scmp.ne.s32.totalorder %s200, %s202
    %p209 = scmp.eq.s32.totalorder %s24, 1
    %p210 = por %p208, %p209
    %p211 = scmp.ne.s32.totalorder %s202, %s203
    %p212 = scmp.eq.s32.totalorder %s24, 0
    %p213 = por %p211, %p212
    %p214 = scmp.ne.s32.totalorder %s202, %s203
    %p215 = scmp.eq.s32.totalorder %s25, 1
    %p216 = por %p214, %p215
    %p218 = scmp.ne.s32.totalorder %s203, %s217
    %p219 = scmp.eq.s32.totalorder %s25, 0
    %p220 = por %p218, %p219
    %s222 = sadd.s32 %s221, 1
    %p225 = scmp.eq.s32.totalorder %s19, 1
    %p226 = scmp.ne.s32.totalorder %s221, %s223
    %p227 = scmp.eq.s32.totalorder %s19, 0
    %p228 = por %p226, %p227
    %p229 = scmp.ne.s32.totalorder %s221, %s223
    %p230 = scmp.eq.s32.totalorder %s24, 1
    %p231 = por %p229, %p230
    %p232 = scmp.ne.s32.totalorder %s223, %s224
    %p233 = scmp.eq.s32.totalorder %s24, 0
    %p234 = por %p232, %p233
    %p235 = scmp.ne.s32.totalorder %s223, %s224
    %p236 = scmp.eq.s32.totalorder %s25, 1
    %p237 = por %p235, %p236
    %p239 = scmp.ne.s32.totalorder %s224, %s238
    %p240 = scmp.eq.s32.totalorder %s25, 0
    %p241 = por %p239, %p240
    %s243 = sadd.s32 %s242, 1
    %p246 = scmp.eq.s32.totalorder %s19, 1
    %p247 = scmp.ne.s32.totalorder %s242, %s244
    %p248 = scmp.eq.s32.totalorder %s19, 0
    %p249 = por %p247, %p248
    %p250 = scmp.ne.s32.totalorder %s242, %s244
    %p251 = scmp.eq.s32.totalorder %s24, 1
    %p252 = por %p250, %p251
    %p253 = scmp.ne.s32.totalorder %s244, %s245
    %p254 = scmp.eq.s32.totalorder %s24, 0
    %p255 = por %p253, %p254
    %p256 = scmp.ne.s32.totalorder %s244, %s245
    %p257 = scmp.eq.s32.totalorder %s25, 1
    %p258 = por %p256, %p257
    %p260 = scmp.ne.s32.totalorder %s245, %s259
    %p261 = scmp.eq.s32.totalorder %s25, 0
    %p262 = por %p260, %p261
    %s264 = sadd.s32 %s263, 1
    %p267 = scmp.eq.s32.totalorder %s19, 1
    %p268 = scmp.ne.s32.totalorder %s263, %s265
    %p269 = scmp.eq.s32.totalorder %s19, 0
    %p270 = por %p268, %p269
    %p271 = scmp.ne.s32.totalorder %s263, %s265
    %p272 = scmp.eq.s32.totalorder %s24, 1
    %p273 = por %p271, %p272
    %p274 = scmp.ne.s32.totalorder %s265, %s266
    %p275 = scmp.eq.s32.totalorder %s24, 0
    %p276 = por %p274, %p275
    %p277 = scmp.ne.s32.totalorder %s265, %s266
    %p278 = scmp.eq.s32.totalorder %s25, 1
    %p279 = por %p277, %p278
    %p281 = scmp.ne.s32.totalorder %s266, %s280
    %p282 = scmp.eq.s32.totalorder %s25, 0
    %p283 = por %p281, %p282
    %s285 = sadd.s32 %s284, 1
    %p288 = scmp.eq.s32.totalorder %s19, 1
    %p289 = scmp.ne.s32.totalorder %s284, %s286
    %p290 = scmp.eq.s32.totalorder %s19, 0
    %p291 = por %p289, %p290
    %p292 = scmp.ne.s32.totalorder %s284, %s286
    %p293 = scmp.eq.s32.totalorder %s24, 1
    %p294 = por %p292, %p293
    %p295 = scmp.ne.s32.totalorder %s286, %s287
    %p296 = scmp.eq.s32.totalorder %s24, 0
    %p297 = por %p295, %p296
    %p298 = scmp.ne.s32.totalorder %s286, %s287
    %p299 = scmp.eq.s32.totalorder %s25, 1
    %p300 = por %p298, %p299
    %p302 = scmp.ne.s32.totalorder %s287, %s301
    %p303 = scmp.eq.s32.totalorder %s25, 0
    %p304 = por %p302, %p303
    %s305 = ssub.s32 %s19, %s26
    %p306 = scmp.eq.s32.totalorder %s305, 0
    %s308 = sadd.s32 %s307, 1
    %s309 = scalar_select %p306, %s307, %s308
    %p312 = pneg %p306
    %p313 = scmp.eq.s32.totalorder %s19, 1
    %p314 = por %p312, %p313
    %p315 = scmp.ne.s32.totalorder %s307, %s310
    %p316 = scmp.eq.s32.totalorder %s19, 0
    %p317 = por %p315, %p316
    %p318 = scmp.ne.s32.totalorder %s307, %s310
    %p319 = scmp.eq.s32.totalorder %s24, 1
    %p320 = por %p318, %p319
    %p321 = scmp.ne.s32.totalorder %s310, %s311
    %p322 = scmp.eq.s32.totalorder %s24, 0
    %p323 = por %p321, %p322
    %p324 = scmp.ne.s32.totalorder %s310, %s311
    %p325 = scmp.eq.s32.totalorder %s25, 1
    %p326 = por %p324, %p325
    %p328 = scmp.ne.s32.totalorder %s311, %s327
    %p329 = scmp.eq.s32.totalorder %s25, 0
    %p330 = por %p328, %p329
    %p331 = scmp.le.s32.totalorder 1, %s19
    %p332 = scmp.lt.s32.totalorder %s19, 3
    %p333 = pnand %p331, %p332
    %p334 = pneg %p333
    // Predicated region
    $region9: #{sc_geo_layout_forward.3} parent=5 // pred_check
      _
    $region10: #{sc_geo_layout_forward.3} parent=5 // pred_check_branch
      %336 = sbr.rel (%p333) target = $region12
    $region11: #{sc_geo_layout_forward.3} parent=5 // pred_region
      %s337 = ssub.s32 %s19, 1
      // Predicated region
      $region13: #{sc_geo_layout_forward.3} parent=11 // pred_check
        %p338 = pneg %p66
      $region14: #{sc_geo_layout_forward.3} parent=11 // pred_check_branch
        %340 = sbr.rel (%p338) target = $region16
      $region15: #{sc_geo_layout_forward.3} parent=11 // pred_region
        _
      $region16: #{sc_geo_layout_forward.3} parent=11 // pred_fallthru
        _
      // Predicated region
      $region17: #{sc_geo_layout_forward.3} parent=11 // pred_check
        %p341 = pneg %p87
      $region18: #{sc_geo_layout_forward.3} parent=11 // pred_check_branch
        %343 = sbr.rel (%p341) target = $region20
      $region19: #{sc_geo_layout_forward.3} parent=11 // pred_region
        _
      $region20: #{sc_geo_layout_forward.3} parent=11 // pred_fallthru
        _
      // Predicated region
      $region21: #{sc_geo_layout_forward.3} parent=11 // pred_check
        %p344 = pneg %p108
      $region22: #{sc_geo_layout_forward.3} parent=11 // pred_check_branch
        %346 = sbr.rel (%p344) target = $region24
      $region23: #{sc_geo_layout_forward.3} parent=11 // pred_region
        _
      $region24: #{sc_geo_layout_forward.3} parent=11 // pred_fallthru
        _
      // Predicated region
      $region25: #{sc_geo_layout_forward.3} parent=11 // pred_check
        %p347 = pneg %p129
      $region26: #{sc_geo_layout_forward.3} parent=11 // pred_check_branch
        %349 = sbr.rel (%p347) target = $region28
      $region27: #{sc_geo_layout_forward.3} parent=11 // pred_region
        _
      $region28: #{sc_geo_layout_forward.3} parent=11 // pred_fallthru
        _
      // Predicated region
      $region29: #{sc_geo_layout_forward.3} parent=11 // pred_check
        %p350 = pneg %p150
      $region30: #{sc_geo_layout_forward.3} parent=11 // pred_check_branch
        %352 = sbr.rel (%p350) target = $region32
      $region31: #{sc_geo_layout_forward.3} parent=11 // pred_region
        _
      $region32: #{sc_geo_layout_forward.3} parent=11 // pred_fallthru
        _
      // Predicated region
      $region33: #{sc_geo_layout_forward.3} parent=11 // pred_check
        %p353 = pneg %p171
      $region34: #{sc_geo_layout_forward.3} parent=11 // pred_check_branch
        %355 = sbr.rel (%p353) target = $region36
      $region35: #{sc_geo_layout_forward.3} parent=11 // pred_region
        _
      $region36: #{sc_geo_layout_forward.3} parent=11 // pred_fallthru
        _
      // Predicated region
      $region37: #{sc_geo_layout_forward.3} parent=11 // pred_check
        %p356 = pneg %p192
      $region38: #{sc_geo_layout_forward.3} parent=11 // pred_check_branch
        %358 = sbr.rel (%p356) target = $region40
      $region39: #{sc_geo_layout_forward.3} parent=11 // pred_region
        _
      $region40: #{sc_geo_layout_forward.3} parent=11 // pred_fallthru
        _
      // Predicated region
      $region41: #{sc_geo_layout_forward.3} parent=11 // pred_check
        %p359 = pneg %p213
      $region42: #{sc_geo_layout_forward.3} parent=11 // pred_check_branch
        %361 = sbr.rel (%p359) target = $region44
      $region43: #{sc_geo_layout_forward.3} parent=11 // pred_region
        _
      $region44: #{sc_geo_layout_forward.3} parent=11 // pred_fallthru
        _
      // Predicated region
      $region45: #{sc_geo_layout_forward.3} parent=11 // pred_check
        %p362 = pneg %p234
      $region46: #{sc_geo_layout_forward.3} parent=11 // pred_check_branch
        %364 = sbr.rel (%p362) target = $region48
      $region47: #{sc_geo_layout_forward.3} parent=11 // pred_region
        _
      $region48: #{sc_geo_layout_forward.3} parent=11 // pred_fallthru
        _
      // Predicated region
      $region49: #{sc_geo_layout_forward.3} parent=11 // pred_check
        %p365 = pneg %p255
      $region50: #{sc_geo_layout_forward.3} parent=11 // pred_check_branch
        %367 = sbr.rel (%p365) target = $region52
      $region51: #{sc_geo_layout_forward.3} parent=11 // pred_region
        _
      $region52: #{sc_geo_layout_forward.3} parent=11 // pred_fallthru
        _
      // Predicated region
      $region53: #{sc_geo_layout_forward.3} parent=11 // pred_check
        %p368 = pneg %p276
      $region54: #{sc_geo_layout_forward.3} parent=11 // pred_check_branch
        %370 = sbr.rel (%p368) target = $region56
      $region55: #{sc_geo_layout_forward.3} parent=11 // pred_region
        _
      $region56: #{sc_geo_layout_forward.3} parent=11 // pred_fallthru
        _
      // Predicated region
      $region57: #{sc_geo_layout_forward.3} parent=11 // pred_check
        %p371 = pneg %p297
      $region58: #{sc_geo_layout_forward.3} parent=11 // pred_check_branch
        %373 = sbr.rel (%p371) target = $region60
      $region59: #{sc_geo_layout_forward.3} parent=11 // pred_region
        _
      $region60: #{sc_geo_layout_forward.3} parent=11 // pred_fallthru
        _
    $region12: #{sc_geo_layout_forward.3} parent=5 // pred_fallthru
      _
    %p374 = scmp.lt.s32.totalorder %s19, 2
    // Predicated region
    $region61: #{sc_geo_layout_forward.3} parent=5 // pred_check
      %p375 = pneg %p374
    $region62: #{sc_geo_layout_forward.3} parent=5 // pred_check_branch
      %377 = sbr.rel (%p375) target = $region64
    $region63: #{sc_geo_layout_forward.3} parent=5 // pred_region
      // Predicated region
      $region65: #{sc_geo_layout_forward.3} parent=63 // pred_check
        %p378 = pneg %p39
      $region66: #{sc_geo_layout_forward.3} parent=63 // pred_check_branch
        %380 = sbr.rel (%p378) target = $region68
      $region67: #{sc_geo_layout_forward.3} parent=63 // pred_region
        %p381 = scmp.lt.s32.totalorder %s19, 1
        %s382 = scalar_select %p381, %s19, 1
        %s383 = smul.addr %s382, 2
        %s384 = smul.addr %s383, 8
        %s385 = scalar_lea.vmem %s0, %s384
      $region68: #{sc_geo_layout_forward.3} parent=63 // pred_fallthru
        _
    $region64: #{sc_geo_layout_forward.3} parent=5 // pred_fallthru
      _
    %p386 = scmp.le.s32.totalorder 1, %s19
    %p387 = scmp.lt.s32.totalorder %s19, 3
    %p388 = pnand %p386, %p387
    %p389 = pneg %p388
    // Predicated region
    $region69: #{sc_geo_layout_forward.3} parent=5 // pred_check
      _
    $region70: #{sc_geo_layout_forward.3} parent=5 // pred_check_branch
      %391 = sbr.rel (%p388) target = $region72
    $region71: #{sc_geo_layout_forward.3} parent=5 // pred_region
      %s392 = ssub.s32 %s19, 1
      %p393 = scmp.lt.s32.totalorder %s24, 1
      %s394 = scalar_select %p393, %s24, 1
      %s395 = smul.addr %s394, 2
      %s396 = smul.addr %s395, 8
      %s397 = scalar_lea.vmem %s0, %s396
      %p398 = pneg %p45
      %p399 = pneg %p42
      %p400 = pneg %p66
      %p401 = pneg %p63
      %p402 = pneg %p87
      %p403 = pneg %p84
      %p404 = pneg %p108
      %p405 = pneg %p105
      %p406 = pneg %p129
      %p407 = pneg %p126
      %p408 = pneg %p150
      %p409 = pneg %p147
      %p410 = pneg %p171
      %p411 = pneg %p168
      %p412 = pneg %p192
      %p413 = pneg %p189
      %p414 = pneg %p213
      %p415 = pneg %p210
      %p416 = pneg %p234
      %p417 = pneg %p231
      %p418 = pneg %p255
      %p419 = pneg %p252
      %p420 = pneg %p276
      %p421 = pneg %p273
      %p422 = pneg %p297
      %p423 = pneg %p294
      %p424 = pneg %p323
      %p425 = pneg %p320
      %p426 = scmp.lt.s32.totalorder %s24, 1
      %s427 = scalar_select %p426, %s24, 1
      %s428 = smul.addr %s427, 2
      %s429 = smul.addr %s428, 8
      %s430 = scalar_lea.vmem %s13, %s429
      %p431 = scmp.lt.s32.totalorder %s24, 1
      %s432 = scalar_select %p431, %s24, 1
      %s433 = smul.addr %s432, 2
      %s434 = smul.addr %s433, 8
      %s435 = scalar_lea.vmem %s0, %s434
      %p436 = scmp.lt.s32.totalorder %s24, 1
      %s437 = scalar_select %p436, %s24, 1
      %s438 = smul.addr %s437, 2
      %s439 = smul.addr %s438, 8
      %s440 = scalar_lea.vmem %s13, %s439
      %v442 = vld [vmem:[%s435] sm:$0xff]
      %v443 = vld [vmem:[%s435 + $0x8] sm:$0xff]
      %v444 = vpack.c.bf16 %v443, %v442
      %v445 = vld [vmem:[%s1] sm:$0xf]
      %v446 = vld [vmem:[%s1 + $0x4] sm:$0xf]
      %v447 = vld [vmem:[%s1 + $0x8] sm:$0xf]
      %v448 = vld [vmem:[%s1 + $0xc] sm:$0xf]
      %v449 = vld [vmem:[%s2] sm:$0x1]
      %v451 = vlaneseq
      %v452 = vshrl.u32 %v451, 7
      %v453 = vsub.s32 0, %v452
      %v454 = vrot.slane %v449, %v453
      %v460 = vunpack.c.l.b16 %v445
      %v461 = vunpack.c.l.b16 %v446
      %v462 = vunpack.c.l.b16 %v447
      %v463 = vunpack.c.l.b16 %v448
      %v464 = vpack.c.b16 %v461, %v460
      %v465 = vpack.c.b16 %v463, %v462
      %vm468 = vcmask 261120
      %v470 = vsel %vm468, %v444, 0
      %472 = vmatprep.subr.bf16.mxu0 0
      %473 = vmatpush1.bf16.msra.mxu0 %v464
      %474 = vmatprep.subr.bf16.mxu0 0
      %475 = vmatpush1.bf16.msra.mxu0 %v465
      %476 = vmatprep.subr.bf16.mxu0 0
      %477 = vmatpush1.bf16.msra.mxu0 0
      %478 = vmatprep.subr.bf16.mxu0 0
      %479 = vmatpush1.bf16.msra.mxu0 0
      %480 = vmatprep.subr.bf16.mxu0 0
      %481 = vmatpush1.bf16.msra.mxu0 0
      %482 = vmatprep.subr.bf16.mxu0 0
      %483 = vmatpush1.bf16.msra.mxu0 0
      %484 = vmatprep.subr.bf16.mxu0 0
      %485 = vmatpush1.bf16.msra.mxu0 0
      %486 = vmatprep.subr.bf16.mxu0 0
      %487 = vmatpush1.bf16.msra.mxu0 0
      %488 = vmatprep.subr.bf16.mxu0 0
      %489 = vmatpush1.bf16.msra.mxu0 0
      %490 = vmatprep.subr.bf16.mxu0 0
      %491 = vmatpush1.bf16.msra.mxu0 0
      %492 = vmatprep.subr.bf16.mxu0 0
      %493 = vmatpush1.bf16.msra.mxu0 0
      %494 = vmatprep.subr.bf16.mxu0 0
      %495 = vmatpush1.bf16.msra.mxu0 0
      %496 = vmatprep.subr.bf16.mxu0 0
      %497 = vmatpush1.bf16.msra.mxu0 0
      %498 = vmatprep.subr.bf16.mxu0 0
      %499 = vmatpush1.bf16.msra.mxu0 0
      %500 = vmatprep.subr.bf16.mxu0 0
      %501 = vmatpush1.bf16.msra.mxu0 0
      %502 = vmatprep.subr.bf16.mxu0 0
      %503 = vmatpush1.bf16.msra.mxu0 0
      %504 = vmatprep.mubr.bf16.mxu0 0
      %505 = vmatmul.mubr.bf16.gmra.mrb[0].mxu0 %v470
      %v506 = vpop.f32.mrb[0].mxu0
      %v507 = vadd.f32 %v454, %v506
      %v508 = vpop.f32.mrb[0].mxu0
      %v509 = vpop.f32.mrb[0].mxu0
      %v510 = vadd.f32 %v454, %v509
      %v511 = vpop.f32.mrb[0].mxu0
      %512 = vdwg.mxu0
      %v513 = vmul.f32 %v507, 0.35355338
      %v514 = vmul.f32 %v510, 0.35355338
      %v515 = vpack.c.bf16 %v514, %v513
      %v516 = vpack.c.bf16 %v510, %v507
      %518 = vrot.lane.b32.xlu0 %v516, 96
      %v519 = vpop.permute.xlu0 %518
      %vm520 = vcmask 64512
      %v522 = vsel %vm520, %v515, 0
      %v525 = vsel %vm520, %v519, 0
      %527 = vmatprep.subr.bf16.mxu0 0
      %528 = vmatpush1.bf16.xpose.msra.mxu0 %v525
      %529 = vmatprep.subr.bf16.mxu0 0
      %530 = vmatpush1.bf16.xpose.msra.mxu0 0
      %531 = vmatprep.subr.bf16.mxu0 0
      %532 = vmatpush1.bf16.xpose.msra.mxu0 0
      %533 = vmatprep.subr.bf16.mxu0 0
      %534 = vmatpush1.bf16.xpose.msra.mxu0 0
      %535 = vmatprep.subr.bf16.mxu0 0
      %536 = vmatpush1.bf16.xpose.msra.mxu0 0
      %537 = vmatprep.subr.bf16.mxu0 0
      %538 = vmatpush1.bf16.xpose.msra.mxu0 0
      %539 = vmatprep.subr.bf16.mxu0 0
      %540 = vmatpush1.bf16.xpose.msra.mxu0 0
      %541 = vmatprep.subr.bf16.mxu0 0
      %542 = vmatpush1.bf16.xpose.msra.mxu0 0
      %543 = vmatprep.subr.bf16.mxu0 0
      %544 = vmatpush1.bf16.xpose.msra.mxu0 0
      %545 = vmatprep.subr.bf16.mxu0 0
      %546 = vmatpush1.bf16.xpose.msra.mxu0 0
      %547 = vmatprep.subr.bf16.mxu0 0
      %548 = vmatpush1.bf16.xpose.msra.mxu0 0
      %549 = vmatprep.subr.bf16.mxu0 0
      %550 = vmatpush1.bf16.xpose.msra.mxu0 0
      %551 = vmatprep.subr.bf16.mxu0 0
      %552 = vmatpush1.bf16.xpose.msra.mxu0 0
      %553 = vmatprep.subr.bf16.mxu0 0
      %554 = vmatpush1.bf16.xpose.msra.mxu0 0
      %555 = vmatprep.subr.bf16.mxu0 0
      %556 = vmatpush1.bf16.xpose.msra.mxu0 0
      %557 = vmatprep.subr.bf16.mxu0 0
      %558 = vmatpush1.bf16.xpose.msra.mxu0 0
      %559 = vmatprep.mubr.bf16.mxu0 0
      %560 = vmatmul.mubr.bf16.gmra.mrb[0].mxu0 %v522
      %v561 = vpop.f32.mrb[0].mxu0
      %v562 = vadd.f32 0.0, %v561
      %v563 = vpop.f32.mrb[0].mxu0
      %v564 = vpop.f32.mrb[0].mxu0
      %v565 = vadd.f32 0.0, %v564
      %v566 = vpop.f32.mrb[0].mxu0
      %567 = vdwg.mxu0
      %vm568 = vcmask 130048
      %v569 = vsel %vm568, %v562, -inf
      %570 = vmax.xlane.f32.xlu0 %v569
      %v571 = vpop.xlane.xlu0 %570
      %v572 = vsel %vm568, %v565, -inf
      %573 = vmax.xlane.f32.xlu0 %v572
      %v574 = vpop.xlane.xlu0 %573
      %v575 = vsub.f32 %v562, %v571
      %v576 = vsub.f32 %v565, %v574
      %v577 = vmul.f32 %v575, 1.442695
      %v578 = vpow.pop %v577
      %v579 = vmul.f32 %v576, 1.442695
      %v580 = vpow.pop %v579
      %v581 = vsel %vm568, %v578, 0.0
      %582 = vadd.xlane.f32.xlu0 %v581
      %v583 = vpop.xlane.xlu0 %582
      %v584 = vsel %vm568, %v580, 0.0
      %585 = vadd.xlane.f32.xlu0 %v584
      %v586 = vpop.xlane.xlu0 %585
      %v587 = vrcp.pop %v583
      %v588 = vrcp.pop %v586
      %v589 = vmul.f32 %v578, %v587
      %v590 = vmul.f32 %v580, %v588
      %v591 = vpack.c.bf16 %v590, %v589
      %592 = vrot.lane.b32.xlu0 %v516, 64
      %v593 = vpop.permute.xlu0 %592
      %v596 = vsel %vm568, %v591, 0
      %598 = vmatprep.subr.bf16.mxu0 0
      %599 = vmatpush1.bf16.msra.mxu0 %v593
      %600 = vmatprep.subr.bf16.mxu0 0
      %601 = vmatpush1.bf16.msra.mxu0 0
      %602 = vmatprep.subr.bf16.mxu0 0
      %603 = vmatpush1.bf16.msra.mxu0 0
      %604 = vmatprep.subr.bf16.mxu0 0
      %605 = vmatpush1.bf16.msra.mxu0 0
      %606 = vmatprep.subr.bf16.mxu0 0
      %607 = vmatpush1.bf16.msra.mxu0 0
      %608 = vmatprep.subr.bf16.mxu0 0
      %609 = vmatpush1.bf16.msra.mxu0 0
      %610 = vmatprep.subr.bf16.mxu0 0
      %611 = vmatpush1.bf16.msra.mxu0 0
      %612 = vmatprep.subr.bf16.mxu0 0
      %613 = vmatpush1.bf16.msra.mxu0 0
      %614 = vmatprep.subr.bf16.mxu0 0
      %615 = vmatpush1.bf16.msra.mxu0 0
      %616 = vmatprep.subr.bf16.mxu0 0
      %617 = vmatpush1.bf16.msra.mxu0 0
      %618 = vmatprep.subr.bf16.mxu0 0
      %619 = vmatpush1.bf16.msra.mxu0 0
      %620 = vmatprep.subr.bf16.mxu0 0
      %621 = vmatpush1.bf16.msra.mxu0 0
      %622 = vmatprep.subr.bf16.mxu0 0
      %623 = vmatpush1.bf16.msra.mxu0 0
      %624 = vmatprep.subr.bf16.mxu0 0
      %625 = vmatpush1.bf16.msra.mxu0 0
      %626 = vmatprep.subr.bf16.mxu0 0
      %627 = vmatpush1.bf16.msra.mxu0 0
      %628 = vmatprep.subr.bf16.mxu0 0
      %629 = vmatpush1.bf16.msra.mxu0 0
      %630 = vmatprep.mubr.bf16.mxu0 0
      %631 = vmatmul.mubr.bf16.gmra.mrb[0].mxu0 %v596
      %v632 = vpop.f32.mrb[0].mxu0
      %v633 = vadd.f32 0.0, %v632
      %v634 = vpop.f32.mrb[0].mxu0
      %v635 = vpop.f32.mrb[0].mxu0
      %v636 = vadd.f32 0.0, %v635
      %v637 = vpop.f32.mrb[0].mxu0
      %638 = vdwg.mxu0
      %640 = vrot.lane.b32.xlu0 %v515, 120
      %v641 = vpop.permute.xlu0 %640
      %642 = vrot.lane.b32.xlu0 %v516, 88
      %v643 = vpop.permute.xlu0 %642
      %v645 = vsel %vm520, %v641, 0
      %v648 = vsel %vm520, %v643, 0
      %650 = vmatprep.subr.bf16.mxu0 0
      %651 = vmatpush1.bf16.xpose.msra.mxu0 %v648
      %652 = vmatprep.subr.bf16.mxu0 0
      %653 = vmatpush1.bf16.xpose.msra.mxu0 0
      %654 = vmatprep.subr.bf16.mxu0 0
      %655 = vmatpush1.bf16.xpose.msra.mxu0 0
      %656 = vmatprep.subr.bf16.mxu0 0
      %657 = vmatpush1.bf16.xpose.msra.mxu0 0
      %658 = vmatprep.subr.bf16.mxu0 0
      %659 = vmatpush1.bf16.xpose.msra.mxu0 0
      %660 = vmatprep.subr.bf16.mxu0 0
      %661 = vmatpush1.bf16.xpose.msra.mxu0 0
      %662 = vmatprep.subr.bf16.mxu0 0
      %663 = vmatpush1.bf16.xpose.msra.mxu0 0
      %664 = vmatprep.subr.bf16.mxu0 0
      %665 = vmatpush1.bf16.xpose.msra.mxu0 0
      %666 = vmatprep.subr.bf16.mxu0 0
      %667 = vmatpush1.bf16.xpose.msra.mxu0 0
      %668 = vmatprep.subr.bf16.mxu0 0
      %669 = vmatpush1.bf16.xpose.msra.mxu0 0
      %670 = vmatprep.subr.bf16.mxu0 0
      %671 = vmatpush1.bf16.xpose.msra.mxu0 0
      %672 = vmatprep.subr.bf16.mxu0 0
      %673 = vmatpush1.bf16.xpose.msra.mxu0 0
      %674 = vmatprep.subr.bf16.mxu0 0
      %675 = vmatpush1.bf16.xpose.msra.mxu0 0
      %676 = vmatprep.subr.bf16.mxu0 0
      %677 = vmatpush1.bf16.xpose.msra.mxu0 0
      %678 = vmatprep.subr.bf16.mxu0 0
      %679 = vmatpush1.bf16.xpose.msra.mxu0 0
      %680 = vmatprep.subr.bf16.mxu0 0
      %681 = vmatpush1.bf16.xpose.msra.mxu0 0
      %682 = vmatprep.mubr.bf16.mxu0 0
      %683 = vmatmul.mubr.bf16.gmra.mrb[0].mxu0 %v645
      %v684 = vpop.f32.mrb[0].mxu0
      %v685 = vadd.f32 0.0, %v684
      %v686 = vpop.f32.mrb[0].mxu0
      %v687 = vpop.f32.mrb[0].mxu0
      %v688 = vadd.f32 0.0, %v687
      %v689 = vpop.f32.mrb[0].mxu0
      %690 = vdwg.mxu0
      %v691 = vsel %vm568, %v685, -inf
      %692 = vmax.xlane.f32.xlu0 %v691
      %v693 = vpop.xlane.xlu0 %692
      %v694 = vsel %vm568, %v688, -inf
      %695 = vmax.xlane.f32.xlu0 %v694
      %v696 = vpop.xlane.xlu0 %695
      %v697 = vsub.f32 %v685, %v693
      %v698 = vsub.f32 %v688, %v696
      %v699 = vmul.f32 %v697, 1.442695
      %v700 = vpow.pop %v699
      %v701 = vmul.f32 %v698, 1.442695
      %v702 = vpow.pop %v701
      %v703 = vsel %vm568, %v700, 0.0
      %704 = vadd.xlane.f32.xlu0 %v703
      %v705 = vpop.xlane.xlu0 %704
      %v706 = vsel %vm568, %v702, 0.0
      %707 = vadd.xlane.f32.xlu0 %v706
      %v708 = vpop.xlane.xlu0 %707
      %v709 = vrcp.pop %v705
      %v710 = vrcp.pop %v708
      %v711 = vmul.f32 %v700, %v709
      %v712 = vmul.f32 %v702, %v710
      %v713 = vpack.c.bf16 %v712, %v711
      %714 = vrot.lane.b32.xlu0 %v516, 56
      %v715 = vpop.permute.xlu0 %714
      %v718 = vsel %vm568, %v713, 0
      %720 = vmatprep.subr.bf16.mxu0 0
      %721 = vmatpush1.bf16.msra.mxu0 %v715
      %722 = vmatprep.subr.bf16.mxu0 0
      %723 = vmatpush1.bf16.msra.mxu0 0
      %724 = vmatprep.subr.bf16.mxu0 0
      %725 = vmatpush1.bf16.msra.mxu0 0
      %726 = vmatprep.subr.bf16.mxu0 0
      %727 = vmatpush1.bf16.msra.mxu0 0
      %728 = vmatprep.subr.bf16.mxu0 0
      %729 = vmatpush1.bf16.msra.mxu0 0
      %730 = vmatprep.subr.bf16.mxu0 0
      %731 = vmatpush1.bf16.msra.mxu0 0
      %732 = vmatprep.subr.bf16.mxu0 0
      %733 = vmatpush1.bf16.msra.mxu0 0
      %734 = vmatprep.subr.bf16.mxu0 0
      %735 = vmatpush1.bf16.msra.mxu0 0
      %736 = vmatprep.subr.bf16.mxu0 0
      %737 = vmatpush1.bf16.msra.mxu0 0
      %738 = vmatprep.subr.bf16.mxu0 0
      %739 = vmatpush1.bf16.msra.mxu0 0
      %740 = vmatprep.subr.bf16.mxu0 0
      %741 = vmatpush1.bf16.msra.mxu0 0
      %742 = vmatprep.subr.bf16.mxu0 0
      %743 = vmatpush1.bf16.msra.mxu0 0
      %744 = vmatprep.subr.bf16.mxu0 0
      %745 = vmatpush1.bf16.msra.mxu0 0
      %746 = vmatprep.subr.bf16.mxu0 0
      %747 = vmatpush1.bf16.msra.mxu0 0
      %748 = vmatprep.subr.bf16.mxu0 0
      %749 = vmatpush1.bf16.msra.mxu0 0
      %750 = vmatprep.subr.bf16.mxu0 0
      %751 = vmatpush1.bf16.msra.mxu0 0
      %752 = vmatprep.mubr.bf16.mxu0 0
      %753 = vmatmul.mubr.bf16.gmra.mrb[0].mxu0 %v718
      %v754 = vpop.f32.mrb[0].mxu0
      %v755 = vadd.f32 0.0, %v754
      %v756 = vpop.f32.mrb[0].mxu0
      %v757 = vpop.f32.mrb[0].mxu0
      %v758 = vadd.f32 0.0, %v757
      %v759 = vpop.f32.mrb[0].mxu0
      %760 = vdwg.mxu0
      %761 = vrot.lane.b32.xlu0 %v515, 112
      %v762 = vpop.permute.xlu0 %761
      %763 = vrot.lane.b32.xlu0 %v516, 80
      %v764 = vpop.permute.xlu0 %763
      %v766 = vsel %vm520, %v762, 0
      %v769 = vsel %vm520, %v764, 0
      %771 = vmatprep.subr.bf16.mxu0 0
      %772 = vmatpush1.bf16.xpose.msra.mxu0 %v769
      %773 = vmatprep.subr.bf16.mxu0 0
      %774 = vmatpush1.bf16.xpose.msra.mxu0 0
      %775 = vmatprep.subr.bf16.mxu0 0
      %776 = vmatpush1.bf16.xpose.msra.mxu0 0
      %777 = vmatprep.subr.bf16.mxu0 0
      %778 = vmatpush1.bf16.xpose.msra.mxu0 0
      %779 = vmatprep.subr.bf16.mxu0 0
      %780 = vmatpush1.bf16.xpose.msra.mxu0 0
      %781 = vmatprep.subr.bf16.mxu0 0
      %782 = vmatpush1.bf16.xpose.msra.mxu0 0
      %783 = vmatprep.subr.bf16.mxu0 0
      %784 = vmatpush1.bf16.xpose.msra.mxu0 0
      %785 = vmatprep.subr.bf16.mxu0 0
      %786 = vmatpush1.bf16.xpose.msra.mxu0 0
      %787 = vmatprep.subr.bf16.mxu0 0
      %788 = vmatpush1.bf16.xpose.msra.mxu0 0
      %789 = vmatprep.subr.bf16.mxu0 0
      %790 = vmatpush1.bf16.xpose.msra.mxu0 0
      %791 = vmatprep.subr.bf16.mxu0 0
      %792 = vmatpush1.bf16.xpose.msra.mxu0 0
      %793 = vmatprep.subr.bf16.mxu0 0
      %794 = vmatpush1.bf16.xpose.msra.mxu0 0
      %795 = vmatprep.subr.bf16.mxu0 0
      %796 = vmatpush1.bf16.xpose.msra.mxu0 0
      %797 = vmatprep.subr.bf16.mxu0 0
      %798 = vmatpush1.bf16.xpose.msra.mxu0 0
      %799 = vmatprep.subr.bf16.mxu0 0
      %800 = vmatpush1.bf16.xpose.msra.mxu0 0
      %801 = vmatprep.subr.bf16.mxu0 0
      %802 = vmatpush1.bf16.xpose.msra.mxu0 0
      %803 = vmatprep.mubr.bf16.mxu0 0
      %804 = vmatmul.mubr.bf16.gmra.mrb[0].mxu0 %v766
      %v805 = vpop.f32.mrb[0].mxu0
      %v806 = vadd.f32 0.0, %v805
      %v807 = vpop.f32.mrb[0].mxu0
      %v808 = vpop.f32.mrb[0].mxu0
      %v809 = vadd.f32 0.0, %v808
      %v810 = vpop.f32.mrb[0].mxu0
      %811 = vdwg.mxu0
      %v812 = vsel %vm568, %v806, -inf
      %813 = vmax.xlane.f32.xlu0 %v812
      %v814 = vpop.xlane.xlu0 %813
      %v815 = vsel %vm568, %v809, -inf
      %816 = vmax.xlane.f32.xlu0 %v815
      %v817 = vpop.xlane.xlu0 %816
      %v818 = vsub.f32 %v806, %v814
      %v819 = vsub.f32 %v809, %v817
      %v820 = vmul.f32 %v818, 1.442695
      %v821 = vpow.pop %v820
      %v822 = vmul.f32 %v819, 1.442695
      %v823 = vpow.pop %v822
      %v824 = vsel %vm568, %v821, 0.0
      %825 = vadd.xlane.f32.xlu0 %v824
      %v826 = vpop.xlane.xlu0 %825
      %v827 = vsel %vm568, %v823, 0.0
      %828 = vadd.xlane.f32.xlu0 %v827
      %v829 = vpop.xlane.xlu0 %828
      %v830 = vrcp.pop %v826
      %v831 = vrcp.pop %v829
      %v832 = vmul.f32 %v821, %v830
      %v833 = vmul.f32 %v823, %v831
      %v834 = vpack.c.bf16 %v833, %v832
      %835 = vrot.lane.b32.xlu0 %v516, 48
      %v836 = vpop.permute.xlu0 %835
      %v839 = vsel %vm568, %v834, 0
      %841 = vmatprep.subr.bf16.mxu0 0
      %842 = vmatpush1.bf16.msra.mxu0 %v836
      %843 = vmatprep.subr.bf16.mxu0 0
      %844 = vmatpush1.bf16.msra.mxu0 0
      %845 = vmatprep.subr.bf16.mxu0 0
      %846 = vmatpush1.bf16.msra.mxu0 0
      %847 = vmatprep.subr.bf16.mxu0 0
      %848 = vmatpush1.bf16.msra.mxu0 0
      %849 = vmatprep.subr.bf16.mxu0 0
      %850 = vmatpush1.bf16.msra.mxu0 0
      %851 = vmatprep.subr.bf16.mxu0 0
      %852 = vmatpush1.bf16.msra.mxu0 0
      %853 = vmatprep.subr.bf16.mxu0 0
      %854 = vmatpush1.bf16.msra.mxu0 0
      %855 = vmatprep.subr.bf16.mxu0 0
      %856 = vmatpush1.bf16.msra.mxu0 0
      %857 = vmatprep.subr.bf16.mxu0 0
      %858 = vmatpush1.bf16.msra.mxu0 0
      %859 = vmatprep.subr.bf16.mxu0 0
      %860 = vmatpush1.bf16.msra.mxu0 0
      %861 = vmatprep.subr.bf16.mxu0 0
      %862 = vmatpush1.bf16.msra.mxu0 0
      %863 = vmatprep.subr.bf16.mxu0 0
      %864 = vmatpush1.bf16.msra.mxu0 0
      %865 = vmatprep.subr.bf16.mxu0 0
      %866 = vmatpush1.bf16.msra.mxu0 0
      %867 = vmatprep.subr.bf16.mxu0 0
      %868 = vmatpush1.bf16.msra.mxu0 0
      %869 = vmatprep.subr.bf16.mxu0 0
      %870 = vmatpush1.bf16.msra.mxu0 0
      %871 = vmatprep.subr.bf16.mxu0 0
      %872 = vmatpush1.bf16.msra.mxu0 0
      %873 = vmatprep.mubr.bf16.mxu0 0
      %874 = vmatmul.mubr.bf16.gmra.mrb[0].mxu0 %v839
      %v875 = vpop.f32.mrb[0].mxu0
      %v876 = vadd.f32 0.0, %v875
      %v877 = vpop.f32.mrb[0].mxu0
      %v878 = vpop.f32.mrb[0].mxu0
      %v879 = vadd.f32 0.0, %v878
      %v880 = vpop.f32.mrb[0].mxu0
      %881 = vdwg.mxu0
      %882 = vrot.lane.b32.xlu0 %v515, 104
      %v883 = vpop.permute.xlu0 %882
      %884 = vrot.lane.b32.xlu0 %v516, 72
      %v885 = vpop.permute.xlu0 %884
      %v887 = vsel %vm520, %v883, 0
      %v890 = vsel %vm520, %v885, 0
      %892 = vmatprep.subr.bf16.mxu0 0
      %893 = vmatpush1.bf16.xpose.msra.mxu0 %v890
      %894 = vmatprep.subr.bf16.mxu0 0
      %895 = vmatpush1.bf16.xpose.msra.mxu0 0
      %896 = vmatprep.subr.bf16.mxu0 0
      %897 = vmatpush1.bf16.xpose.msra.mxu0 0
      %898 = vmatprep.subr.bf16.mxu0 0
      %899 = vmatpush1.bf16.xpose.msra.mxu0 0
      %900 = vmatprep.subr.bf16.mxu0 0
      %901 = vmatpush1.bf16.xpose.msra.mxu0 0
      %902 = vmatprep.subr.bf16.mxu0 0
      %903 = vmatpush1.bf16.xpose.msra.mxu0 0
      %904 = vmatprep.subr.bf16.mxu0 0
      %905 = vmatpush1.bf16.xpose.msra.mxu0 0
      %906 = vmatprep.subr.bf16.mxu0 0
      %907 = vmatpush1.bf16.xpose.msra.mxu0 0
      %908 = vmatprep.subr.bf16.mxu0 0
      %909 = vmatpush1.bf16.xpose.msra.mxu0 0
      %910 = vmatprep.subr.bf16.mxu0 0
      %911 = vmatpush1.bf16.xpose.msra.mxu0 0
      %912 = vmatprep.subr.bf16.mxu0 0
      %913 = vmatpush1.bf16.xpose.msra.mxu0 0
      %914 = vmatprep.subr.bf16.mxu0 0
      %915 = vmatpush1.bf16.xpose.msra.mxu0 0
      %916 = vmatprep.subr.bf16.mxu0 0
      %917 = vmatpush1.bf16.xpose.msra.mxu0 0
      %918 = vmatprep.subr.bf16.mxu0 0
      %919 = vmatpush1.bf16.xpose.msra.mxu0 0
      %920 = vmatprep.subr.bf16.mxu0 0
      %921 = vmatpush1.bf16.xpose.msra.mxu0 0
      %922 = vmatprep.subr.bf16.mxu0 0
      %923 = vmatpush1.bf16.xpose.msra.mxu0 0
      %924 = vmatprep.mubr.bf16.mxu0 0
      %925 = vmatmul.mubr.bf16.gmra.mrb[0].mxu0 %v887
      %v926 = vpop.f32.mrb[0].mxu0
      %v927 = vadd.f32 0.0, %v926
      %v928 = vpop.f32.mrb[0].mxu0
      %v929 = vpop.f32.mrb[0].mxu0
      %v930 = vadd.f32 0.0, %v929
      %v931 = vpop.f32.mrb[0].mxu0
      %932 = vdwg.mxu0
      %v933 = vsel %vm568, %v927, -inf
      %934 = vmax.xlane.f32.xlu0 %v933
      %v935 = vpop.xlane.xlu0 %934
      %v936 = vsel %vm568, %v930, -inf
      %937 = vmax.xlane.f32.xlu0 %v936
      %v938 = vpop.xlane.xlu0 %937
      %v939 = vsub.f32 %v927, %v935
      %v940 = vsub.f32 %v930, %v938
      %v941 = vmul.f32 %v939, 1.442695
      %v942 = vpow.pop %v941
      %v943 = vmul.f32 %v940, 1.442695
      %v944 = vpow.pop %v943
      %v945 = vsel %vm568, %v942, 0.0
      %946 = vadd.xlane.f32.xlu0 %v945
      %v947 = vpop.xlane.xlu0 %946
      %v948 = vsel %vm568, %v944, 0.0
      %949 = vadd.xlane.f32.xlu0 %v948
      %v950 = vpop.xlane.xlu0 %949
      %v951 = vrcp.pop %v947
      %v952 = vrcp.pop %v950
      %v953 = vmul.f32 %v942, %v951
      %v954 = vmul.f32 %v944, %v952
      %v955 = vpack.c.bf16 %v954, %v953
      %956 = vrot.lane.b32.xlu0 %v516, 40
      %v957 = vpop.permute.xlu0 %956
      %v960 = vsel %vm568, %v955, 0
      %962 = vmatprep.subr.bf16.mxu0 0
      %963 = vmatpush1.bf16.msra.mxu0 %v957
      %964 = vmatprep.subr.bf16.mxu0 0
      %965 = vmatpush1.bf16.msra.mxu0 0
      %966 = vmatprep.subr.bf16.mxu0 0
      %967 = vmatpush1.bf16.msra.mxu0 0
      %968 = vmatprep.subr.bf16.mxu0 0
      %969 = vmatpush1.bf16.msra.mxu0 0
      %970 = vmatprep.subr.bf16.mxu0 0
      %971 = vmatpush1.bf16.msra.mxu0 0
      %972 = vmatprep.subr.bf16.mxu0 0
      %973 = vmatpush1.bf16.msra.mxu0 0
      %974 = vmatprep.subr.bf16.mxu0 0
      %975 = vmatpush1.bf16.msra.mxu0 0
      %976 = vmatprep.subr.bf16.mxu0 0
      %977 = vmatpush1.bf16.msra.mxu0 0
      %978 = vmatprep.subr.bf16.mxu0 0
      %979 = vmatpush1.bf16.msra.mxu0 0
      %980 = vmatprep.subr.bf16.mxu0 0
      %981 = vmatpush1.bf16.msra.mxu0 0
      %982 = vmatprep.subr.bf16.mxu0 0
      %983 = vmatpush1.bf16.msra.mxu0 0
      %984 = vmatprep.subr.bf16.mxu0 0
      %985 = vmatpush1.bf16.msra.mxu0 0
      %986 = vmatprep.subr.bf16.mxu0 0
      %987 = vmatpush1.bf16.msra.mxu0 0
      %988 = vmatprep.subr.bf16.mxu0 0
      %989 = vmatpush1.bf16.msra.mxu0 0
      %990 = vmatprep.subr.bf16.mxu0 0
      %991 = vmatpush1.bf16.msra.mxu0 0
      %992 = vmatprep.subr.bf16.mxu0 0
      %993 = vmatpush1.bf16.msra.mxu0 0
      %994 = vmatprep.mubr.bf16.mxu0 0
      %995 = vmatmul.mubr.bf16.gmra.mrb[0].mxu0 %v960
      %v996 = vpop.f32.mrb[0].mxu0
      %v997 = vadd.f32 0.0, %v996
      %v998 = vpop.f32.mrb[0].mxu0
      %v999 = vpop.f32.mrb[0].mxu0
      %v1000 = vadd.f32 0.0, %v999
      %v1001 = vpop.f32.mrb[0].mxu0
      %1002 = vdwg.mxu0
      %1005 = vrot.lane.b32.xlu0 %v755, 8
      %v1006 = vpop.permute.xlu0 %1005
      %1007 = vrot.lane.b32.xlu0 %v758, 8
      %v1008 = vpop.permute.xlu0 %1007
      %1013 = vrot.lane.b32.xlu0 %v876, 16
      %v1014 = vpop.permute.xlu0 %1013
      %1015 = vrot.lane.b32.xlu0 %v879, 16
      %v1016 = vpop.permute.xlu0 %1015
      %1021 = vrot.lane.b32.xlu0 %v997, 24
      %v1022 = vpop.permute.xlu0 %1021
      %1023 = vrot.lane.b32.xlu0 %v1000, 24
      %v1024 = vpop.permute.xlu0 %1023
      %v1027 = vsel %vm520, %v633, %v1006
      %v1028 = vsel %vm520, %v636, %v1008
      %v1029 = vsel %vm568, %v1027, %v1014
      %v1030 = vsel %vm568, %v1028, %v1016
      %vm1031 = vcmask 195584
      %v1032 = vsel %vm1031, %v1029, %v1022
      %v1033 = vsel %vm1031, %v1030, %v1024
      %v1034 = vpack.c.bf16 %v1033, %v1032
      %v1035 = vld [vmem:[%s3] sm:$0xf]
      %v1036 = vld [vmem:[%s3 + $0x4] sm:$0xf]
      %v1037 = vld [vmem:[%s3 + $0x8] sm:$0xf]
      %v1038 = vld [vmem:[%s3 + $0xc] sm:$0xf]
      %v1039 = vld [vmem:[%s4] sm:$0x1]
      %v1041 = vlaneseq
      %v1042 = vshrl.u32 %v1041, 7
      %v1043 = vsub.s32 0, %v1042
      %v1044 = vrot.slane %v1039, %v1043
      %v1050 = vunpack.c.l.b16 %v1035
      %v1051 = vunpack.c.l.b16 %v1036
      %v1052 = vunpack.c.l.b16 %v1037
      %v1053 = vunpack.c.l.b16 %v1038
      %v1054 = vpack.c.b16 %v1051, %v1050
      %v1055 = vpack.c.b16 %v1053, %v1052
      %v1059 = vsel %vm468, %v1034, 0
      %1061 = vmatprep.subr.bf16.mxu0 0
      %1062 = vmatpush1.bf16.msra.mxu0 %v1054
      %1063 = vmatprep.subr.bf16.mxu0 0
      %1064 = vmatpush1.bf16.msra.mxu0 %v1055
      %1065 = vmatprep.subr.bf16.mxu0 0
      %1066 = vmatpush1.bf16.msra.mxu0 0
      %1067 = vmatprep.subr.bf16.mxu0 0
      %1068 = vmatpush1.bf16.msra.mxu0 0
      %1069 = vmatprep.subr.bf16.mxu0 0
      %1070 = vmatpush1.bf16.msra.mxu0 0
      %1071 = vmatprep.subr.bf16.mxu0 0
      %1072 = vmatpush1.bf16.msra.mxu0 0
      %1073 = vmatprep.subr.bf16.mxu0 0
      %1074 = vmatpush1.bf16.msra.mxu0 0
      %1075 = vmatprep.subr.bf16.mxu0 0
      %1076 = vmatpush1.bf16.msra.mxu0 0
      %1077 = vmatprep.subr.bf16.mxu0 0
      %1078 = vmatpush1.bf16.msra.mxu0 0
      %1079 = vmatprep.subr.bf16.mxu0 0
      %1080 = vmatpush1.bf16.msra.mxu0 0
      %1081 = vmatprep.subr.bf16.mxu0 0
      %1082 = vmatpush1.bf16.msra.mxu0 0
      %1083 = vmatprep.subr.bf16.mxu0 0
      %1084 = vmatpush1.bf16.msra.mxu0 0
      %1085 = vmatprep.subr.bf16.mxu0 0
      %1086 = vmatpush1.bf16.msra.mxu0 0
      %1087 = vmatprep.subr.bf16.mxu0 0
      %1088 = vmatpush1.bf16.msra.mxu0 0
      %1089 = vmatprep.subr.bf16.mxu0 0
      %1090 = vmatpush1.bf16.msra.mxu0 0
      %1091 = vmatprep.subr.bf16.mxu0 0
      %1092 = vmatpush1.bf16.msra.mxu0 0
      %1093 = vmatprep.mubr.bf16.mxu0 0
      %1094 = vmatmul.mubr.bf16.gmra.mrb[0].mxu0 %v1059
      %v1095 = vpop.f32.mrb[0].mxu0
      %v1096 = vadd.f32 %v1044, %v1095
      %v1097 = vpop.f32.mrb[0].mxu0
      %v1098 = vpop.f32.mrb[0].mxu0
      %v1099 = vadd.f32 %v1044, %v1098
      %v1100 = vpop.f32.mrb[0].mxu0
      %1101 = vdwg.mxu0
      %v1102 = vadd.f32 %v442, %v1096
      %v1103 = vadd.f32 %v443, %v1099
      %v1104 = vld [vmem:[%s5] sm:$0x1]
      %v1105 = vld [vmem:[%s6] sm:$0x1]
      %v1106 = vsel %vm468, %v1102, 0.0
      %1107 = vadd.xlane.f32.xlu0 %v1106
      %v1108 = vpop.xlane.xlu0 %1107
      %v1109 = vsel %vm468, %v1103, 0.0
      %1110 = vadd.xlane.f32.xlu0 %v1109
      %v1111 = vpop.xlane.xlu0 %1110
      %v1112 = vrcp.pop 32.0
      %v1113 = vmul.f32 %v1108, %v1112
      %v1114 = vmul.f32 %v1111, %v1112
      %v1115 = vsub.f32 %v1102, %v1113
      %v1116 = vsub.f32 %v1103, %v1114
      %v1117 = vmul.f32 %v1115, %v1115
      %v1118 = vmul.f32 %v1116, %v1116
      %v1119 = vsel %vm468, %v1117, 0.0
      %1120 = vadd.xlane.f32.xlu0 %v1119
      %v1121 = vpop.xlane.xlu0 %1120
      %v1122 = vsel %vm468, %v1118, 0.0
      %1123 = vadd.xlane.f32.xlu0 %v1122
      %v1124 = vpop.xlane.xlu0 %1123
      %v1125 = vmul.f32 %v1121, %v1112
      %v1126 = vmul.f32 %v1124, %v1112
      %v1127 = vadd.f32 %v1125, 1e-05
      %v1128 = vadd.f32 %v1126, 1e-05
      %v1129 = vrsqrt.pop %v1127
      %v1130 = vrsqrt.pop %v1128
      %v1131 = vmul.f32 %v1115, %v1129
      %v1132 = vmul.f32 %v1116, %v1130
      %v1134 = vlaneseq
      %v1135 = vshrl.u32 %v1134, 7
      %v1136 = vsub.s32 0, %v1135
      %v1137 = vrot.slane %v1104, %v1136
      %v1139 = vmul.f32 %v1131, %v1137
      %v1140 = vmul.f32 %v1132, %v1137
      %v1142 = vlaneseq
      %v1143 = vshrl.u32 %v1142, 7
      %v1144 = vsub.s32 0, %v1143
      %v1145 = vrot.slane %v1105, %v1144
      %v1147 = vadd.f32 %v1139, %v1145
      %v1148 = vadd.f32 %v1140, %v1145
      %v1149 = vpack.c.bf16 %v1148, %v1147
      %v1150 = vld [vmem:[%s7] sm:$0xf]
      %v1151 = vld [vmem:[%s7 + $0x4] sm:$0xf]
      %v1152 = vld [vmem:[%s7 + $0x8] sm:$0xf]
      %v1153 = vld [vmem:[%s7 + $0xc] sm:$0xf]
      %v1154 = vld [vmem:[%s8] sm:$0x1]
      %v1156 = vlaneseq
      %v1157 = vshrl.u32 %v1156, 7
      %v1158 = vsub.s32 0, %v1157
      %v1159 = vrot.slane %v1154, %v1158
      %v1165 = vunpack.c.l.b16 %v1150
      %v1166 = vunpack.c.l.b16 %v1151
      %v1167 = vunpack.c.l.b16 %v1152
      %v1168 = vunpack.c.l.b16 %v1153
      %v1169 = vpack.c.b16 %v1166, %v1165
      %v1170 = vpack.c.b16 %v1168, %v1167
      %v1174 = vsel %vm468, %v1149, 0
      %1176 = vmatprep.subr.bf16.mxu0 0
      %1177 = vmatpush1.bf16.msra.mxu0 %v1169
      %1178 = vmatprep.subr.bf16.mxu0 0
      %1179 = vmatpush1.bf16.msra.mxu0 %v1170
      %1180 = vmatprep.subr.bf16.mxu0 0
      %1181 = vmatpush1.bf16.msra.mxu0 0
      %1182 = vmatprep.subr.bf16.mxu0 0
      %1183 = vmatpush1.bf16.msra.mxu0 0
      %1184 = vmatprep.subr.bf16.mxu0 0
      %1185 = vmatpush1.bf16.msra.mxu0 0
      %1186 = vmatprep.subr.bf16.mxu0 0
      %1187 = vmatpush1.bf16.msra.mxu0 0
      %1188 = vmatprep.subr.bf16.mxu0 0
      %1189 = vmatpush1.bf16.msra.mxu0 0
      %1190 = vmatprep.subr.bf16.mxu0 0
      %1191 = vmatpush1.bf16.msra.mxu0 0
      %1192 = vmatprep.subr.bf16.mxu0 0
      %1193 = vmatpush1.bf16.msra.mxu0 0
      %1194 = vmatprep.subr.bf16.mxu0 0
      %1195 = vmatpush1.bf16.msra.mxu0 0
      %1196 = vmatprep.subr.bf16.mxu0 0
      %1197 = vmatpush1.bf16.msra.mxu0 0
      %1198 = vmatprep.subr.bf16.mxu0 0
      %1199 = vmatpush1.bf16.msra.mxu0 0
      %1200 = vmatprep.subr.bf16.mxu0 0
      %1201 = vmatpush1.bf16.msra.mxu0 0
      %1202 = vmatprep.subr.bf16.mxu0 0
      %1203 = vmatpush1.bf16.msra.mxu0 0
      %1204 = vmatprep.subr.bf16.mxu0 0
      %1205 = vmatpush1.bf16.msra.mxu0 0
      %1206 = vmatprep.subr.bf16.mxu0 0
      %1207 = vmatpush1.bf16.msra.mxu0 0
      %1208 = vmatprep.mubr.bf16.mxu0 0
      %1209 = vmatmul.mubr.bf16.gmra.mrb[0].mxu0 %v1174
      %v1210 = vpop.f32.mrb[0].mxu0
      %v1211 = vadd.f32 %v1159, %v1210
      %v1212 = vpop.f32.mrb[0].mxu0
      %v1213 = vpop.f32.mrb[0].mxu0
      %v1214 = vadd.f32 %v1159, %v1213
      %v1215 = vpop.f32.mrb[0].mxu0
      %1216 = vdwg.mxu0
      %v1217 = vmul.f32 %v1211, 0.5
      %v1218 = vmul.f32 %v1214, 0.5
      %v1219 = vmul.f32 %v1211, 0.70710677
      %v1220 = vmul.f32 %v1214, 0.70710677
      %vm1221 = vcmp.ge.f32.partialorder %v1219, 0.0
      %vm1222 = vcmp.ge.f32.partialorder %v1220, 0.0
      %v1223 = vsel %vm1221, 1.0, -1.0
      %v1224 = vsel %vm1222, 1.0, -1.0
      %v1225 = vand.u32 2147483647, %v1219
      %v1226 = vand.u32 2147483647, %v1220
      %v1227 = vmul.f32 %v1225, 0.3275911
      %v1228 = vmul.f32 %v1226, 0.3275911
      %v1229 = vadd.f32 %v1227, 1.0
      %v1230 = vadd.f32 %v1228, 1.0
      %v1231 = vrcp.pop %v1229
      %v1232 = vmul.f32 1.0, %v1231
      %v1233 = vrcp.pop %v1230
      %v1234 = vmul.f32 1.0, %v1233
      %v1235 = vmul.f32 %v1232, 1.0614054
      %v1236 = vmul.f32 %v1234, 1.0614054
      %v1237 = vadd.f32 %v1235, -1.4531521
      %v1238 = vadd.f32 %v1236, -1.4531521
      %v1239 = vmul.f32 %v1237, %v1232
      %v1240 = vmul.f32 %v1238, %v1234
      %v1241 = vadd.f32 %v1239, 1.4214138
      %v1242 = vadd.f32 %v1240, 1.4214138
      %v1243 = vmul.f32 %v1241, %v1232
      %v1244 = vmul.f32 %v1242, %v1234
      %v1245 = vadd.f32 %v1243, -0.28449672
      %v1246 = vadd.f32 %v1244, -0.28449672
      %v1247 = vmul.f32 %v1245, %v1232
      %v1248 = vmul.f32 %v1246, %v1234
      %v1249 = vadd.f32 %v1247, 0.2548296
      %v1250 = vadd.f32 %v1248, 0.2548296
      %v1251 = vmul.f32 %v1249, %v1232
      %v1252 = vmul.f32 %v1250, %v1234
      %v1253 = vsub.f32 0.0, %v1225
      %v1254 = vsub.f32 0.0, %v1226
      %v1255 = vmul.f32 %v1253, %v1225
      %v1256 = vmul.f32 %v1254, %v1226
      %v1257 = vmul.f32 %v1255, 1.442695
      %v1258 = vpow.pop %v1257
      %v1259 = vmul.f32 %v1256, 1.442695
      %v1260 = vpow.pop %v1259
      %v1261 = vmul.f32 %v1251, %v1258
      %v1262 = vmul.f32 %v1252, %v1260
      %v1263 = vsub.f32 1.0, %v1261
      %v1264 = vsub.f32 1.0, %v1262
      %v1265 = vmul.f32 %v1223, %v1263
      %v1266 = vmul.f32 %v1224, %v1264
      %v1267 = vadd.f32 %v1265, 1.0
      %v1268 = vadd.f32 %v1266, 1.0
      %v1269 = vmul.f32 %v1217, %v1267
      %v1270 = vmul.f32 %v1218, %v1268
      %v1271 = vpack.c.bf16 %v1270, %v1269
      %v1272 = vld [vmem:[%s9] sm:$0xf]
      %v1273 = vld [vmem:[%s9 + $0x4] sm:$0xf]
      %v1274 = vld [vmem:[%s9 + $0x8] sm:$0xf]
      %v1275 = vld [vmem:[%s9 + $0xc] sm:$0xf]
      %v1276 = vld [vmem:[%s9 + $0x10] sm:$0xf]
      %v1277 = vld [vmem:[%s9 + $0x14] sm:$0xf]
      %v1278 = vld [vmem:[%s9 + $0x18] sm:$0xf]
      %v1279 = vld [vmem:[%s9 + $0x1c] sm:$0xf]
      %v1280 = vld [vmem:[%s10] sm:$0x1]
      %v1282 = vlaneseq
      %v1283 = vshrl.u32 %v1282, 7
      %v1284 = vsub.s32 0, %v1283
      %v1285 = vrot.slane %v1280, %v1284
      %v1295 = vunpack.c.l.b16 %v1272
      %v1296 = vunpack.c.l.b16 %v1273
      %v1297 = vunpack.c.l.b16 %v1274
      %v1298 = vunpack.c.l.b16 %v1275
      %v1299 = vunpack.c.l.b16 %v1276
      %v1300 = vunpack.c.l.b16 %v1277
      %v1301 = vunpack.c.l.b16 %v1278
      %v1302 = vunpack.c.l.b16 %v1279
      %v1303 = vpack.c.b16 %v1296, %v1295
      %v1304 = vpack.c.b16 %v1298, %v1297
      %v1305 = vpack.c.b16 %v1300, %v1299
      %v1306 = vpack.c.b16 %v1302, %v1301
      %vm1311 = vcmask 523264
      %v1313 = vsel %vm1311, %v1271, 0
      %1315 = vmatprep.subr.bf16.mxu0 0
      %1316 = vmatpush1.bf16.msra.mxu0 %v1303
      %1317 = vmatprep.subr.bf16.mxu0 0
      %1318 = vmatpush1.bf16.msra.mxu0 %v1304
      %1319 = vmatprep.subr.bf16.mxu0 0
      %1320 = vmatpush1.bf16.msra.mxu0 %v1305
      %1321 = vmatprep.subr.bf16.mxu0 0
      %1322 = vmatpush1.bf16.msra.mxu0 %v1306
      %1323 = vmatprep.subr.bf16.mxu0 0
      %1324 = vmatpush1.bf16.msra.mxu0 0
      %1325 = vmatprep.subr.bf16.mxu0 0
      %1326 = vmatpush1.bf16.msra.mxu0 0
      %1327 = vmatprep.subr.bf16.mxu0 0
      %1328 = vmatpush1.bf16.msra.mxu0 0
      %1329 = vmatprep.subr.bf16.mxu0 0
      %1330 = vmatpush1.bf16.msra.mxu0 0
      %1331 = vmatprep.subr.bf16.mxu0 0
      %1332 = vmatpush1.bf16.msra.mxu0 0
      %1333 = vmatprep.subr.bf16.mxu0 0
      %1334 = vmatpush1.bf16.msra.mxu0 0
      %1335 = vmatprep.subr.bf16.mxu0 0
      %1336 = vmatpush1.bf16.msra.mxu0 0
      %1337 = vmatprep.subr.bf16.mxu0 0
      %1338 = vmatpush1.bf16.msra.mxu0 0
      %1339 = vmatprep.subr.bf16.mxu0 0
      %1340 = vmatpush1.bf16.msra.mxu0 0
      %1341 = vmatprep.subr.bf16.mxu0 0
      %1342 = vmatpush1.bf16.msra.mxu0 0
      %1343 = vmatprep.subr.bf16.mxu0 0
      %1344 = vmatpush1.bf16.msra.mxu0 0
      %1345 = vmatprep.subr.bf16.mxu0 0
      %1346 = vmatpush1.bf16.msra.mxu0 0
      %1347 = vmatprep.mubr.bf16.mxu0 0
      %1348 = vmatmul.mubr.bf16.gmra.mrb[0].mxu0 %v1313
      %v1349 = vpop.f32.mrb[0].mxu0
      %v1350 = vadd.f32 %v1285, %v1349
      %v1351 = vpop.f32.mrb[0].mxu0
      %v1352 = vpop.f32.mrb[0].mxu0
      %v1353 = vadd.f32 %v1285, %v1352
      %v1354 = vpop.f32.mrb[0].mxu0
      %1355 = vdwg.mxu0
      %v1356 = vadd.f32 %v1147, %v1350
      %v1357 = vadd.f32 %v1148, %v1353
      %v1358 = vld [vmem:[%s11] sm:$0x1]
      %v1359 = vld [vmem:[%s12] sm:$0x1]
      %v1360 = vsel %vm468, %v1356, 0.0
      %1361 = vadd.xlane.f32.xlu0 %v1360
      %v1362 = vpop.xlane.xlu0 %1361
      %v1363 = vsel %vm468, %v1357, 0.0
      %1364 = vadd.xlane.f32.xlu0 %v1363
      %v1365 = vpop.xlane.xlu0 %1364
      %v1366 = vmul.f32 %v1362, %v1112
      %v1367 = vmul.f32 %v1365, %v1112
      %v1368 = vsub.f32 %v1356, %v1366
      %v1369 = vsub.f32 %v1357, %v1367
      %v1370 = vmul.f32 %v1368, %v1368
      %v1371 = vmul.f32 %v1369, %v1369
      %v1372 = vsel %vm468, %v1370, 0.0
      %1373 = vadd.xlane.f32.xlu0 %v1372
      %v1374 = vpop.xlane.xlu0 %1373
      %v1375 = vsel %vm468, %v1371, 0.0
      %1376 = vadd.xlane.f32.xlu0 %v1375
      %v1377 = vpop.xlane.xlu0 %1376
      %v1378 = vmul.f32 %v1374, %v1112
      %v1379 = vmul.f32 %v1377, %v1112
      %v1380 = vadd.f32 %v1378, 1e-05
      %v1381 = vadd.f32 %v1379, 1e-05
      %v1382 = vrsqrt.pop %v1380
      %v1383 = vrsqrt.pop %v1381
      %v1384 = vmul.f32 %v1368, %v1382
      %v1385 = vmul.f32 %v1369, %v1383
      %v1387 = vlaneseq
      %v1388 = vshrl.u32 %v1387, 7
      %v1389 = vsub.s32 0, %v1388
      %v1390 = vrot.slane %v1358, %v1389
      %v1392 = vmul.f32 %v1384, %v1390
      %v1393 = vmul.f32 %v1385, %v1390
      %v1395 = vlaneseq
      %v1396 = vshrl.u32 %v1395, 7
      %v1397 = vsub.s32 0, %v1396
      %v1398 = vrot.slane %v1359, %v1397
      %v1400 = vadd.f32 %v1392, %v1398
      %v1401 = vadd.f32 %v1393, %v1398
      %1402 = vst.msk [vmem:[%s440] sm:$0xff] %vm468, %v1400
      %1403 = vst.msk [vmem:[%s440 + $0x8] sm:$0xff] %vm468, %v1401
      %p1404 = scmp.lt.s32.totalorder %s24, 1
      %s1405 = scalar_select %p1404, %s24, 1
      %s1406 = smul.addr %s1405, 2
      %s1407 = smul.addr %s1406, 8
      %s1408 = scalar_lea.vmem %s13, %s1407
      // Predicated region
      $region73: #{sc_geo_layout_forward.3} parent=71 // pred_check
        %p1409 = pneg %p320
      $region74: #{sc_geo_layout_forward.3} parent=71 // pred_check_branch
        %1411 = sbr.rel (%p1409) target = $region76
      $region75: #{sc_geo_layout_forward.3} parent=71 // pred_region
        _
      $region76: #{sc_geo_layout_forward.3} parent=71 // pred_fallthru
        _
    $region72: #{sc_geo_layout_forward.3} parent=5 // pred_fallthru
      _
    %p1412 = scmp.le.s32.totalorder 2, %s19
    // Predicated region
    $region77: #{sc_geo_layout_forward.3} parent=5 // pred_check
      %p1413 = pneg %p1412
    $region78: #{sc_geo_layout_forward.3} parent=5 // pred_check_branch
      %1415 = sbr.rel (%p1413) target = $region80
    $region79: #{sc_geo_layout_forward.3} parent=5 // pred_region
      %s1416 = ssub.s32 %s19, 2
      // Predicated region
      $region81: #{sc_geo_layout_forward.3} parent=79 // pred_check
        %p1417 = pneg %p326
      $region82: #{sc_geo_layout_forward.3} parent=79 // pred_check_branch
        %1419 = sbr.rel (%p1417) target = $region84
      $region83: #{sc_geo_layout_forward.3} parent=79 // pred_region
        %p1420 = scmp.lt.s32.totalorder %s25, 1
        %s1421 = scalar_select %p1420, %s25, 1
        %s1422 = smul.addr %s1421, 2
        %s1423 = smul.addr %s1422, 8
        %s1424 = scalar_lea.vmem %s13, %s1423
      $region84: #{sc_geo_layout_forward.3} parent=79 // pred_fallthru
        _
    $region80: #{sc_geo_layout_forward.3} parent=5 // pred_fallthru
      _
  $region6: #{sc_geo_layout_forward.3} parent=0 // loop_footer
    %s23 = sadd.s32 1, %s19
  $region7: #{sc_geo_layout_forward.3} parent=0 // loop_footer_branch
    %18 = sbr.rel target = $region3
  $region8: #{sc_geo_layout_forward.3} parent=0 // loop_exit
    _

</llo_original>
